<compile_context>
chip_gen: v7x
topology: tpu7x:2x2x1
jax: 0.10.0
libtpu: 0.0.40
codegen_flags: <defaults>
</compile_context>

<pallas_src>
import jax
import jax.numpy as jnp
from jax.experimental import pallas as pl
from jax.experimental.pallas import tpu as pltpu
import numpy as np


def _pick_tk(G, budget_bytes=1 << 20):
    """Largest key-slab length TK (preferably a multiple of 8) that divides G
    and keeps the (TK, G) f32 score slab under `budget_bytes`."""
    cap = max(1, budget_bytes // (4 * G))
    best_aligned = 0
    best_any = 0
    for t in range(1, min(G, cap) + 1):
        if G % t == 0:
            best_any = t
            if t % 8 == 0:
                best_aligned = t
    if best_aligned:
        return best_aligned
    if best_any:
        return best_any
    # TODO(synk): for G with no small divisor, fall back to masked ragged
    #             key slabs instead of the full-G slab.
    return G


def _multiattention_kernel(w0_ref, x_ref, xt_ref, wq_ref, wk_ref, wv_ref,
                           wkt_ref, wvt_ref, o_ref):
    """One grid step == one tile of TB batch rows; heads looped on-chip."""
    x = x_ref[...]                       # (TB, G)  rows on sublanes, genes on lanes
    xt = xt_ref[0]                       # (G, TB)  genes on sublanes, rows on lanes
    TB, G = x.shape
    H = wq_ref.shape[0]
    TK = _pick_tk(G)

    acc = jnp.zeros((TB, G), jnp.float32)
    # Heads / rows / key-slabs are short static trip counts -> fully unrolled
    # Python loops (no rolled-loop pipelining barrier for the scheduler).
    for h in range(H):
        q = x * wq_ref[h:h + 1, :]       # (TB, G)
        k = x * wk_ref[h:h + 1, :]       # (TB, G)
        v = x * wv_ref[h:h + 1, :]       # (TB, G)
        kt = xt * wkt_ref[:, h:h + 1]    # (G, TB)  per-row keys on sublanes
        vt = xt * wvt_ref[:, h:h + 1]    # (G, TB)  per-row values on sublanes

        # Analytic row max of s[i, j] = q[i]*k[j] (exact, O(G) work — no
        # (G, G) cross-lane reduce needed).
        kmax = jnp.max(k, axis=-1, keepdims=True)      # (TB, 1)
        kmin = jnp.min(k, axis=-1, keepdims=True)      # (TB, 1)
        m = jnp.where(q >= 0.0, q * kmax, q * kmin)    # (TB, G)

        # Diagonal term e[i, i] for the post-softmax mask correction.
        e_diag = jnp.exp(q * k - m)                    # (TB, G)

        num_rows = []
        den_rows = []
        for b in range(TB):
            q_b = q[b:b + 1, :]          # (1, G)
            m_b = m[b:b + 1, :]          # (1, G)
            kt_b = kt[:, b:b + 1]        # (G, 1)
            vt_b = vt[:, b:b + 1]        # (G, 1)
            num = jnp.zeros((1, G), jnp.float32)
            den = jnp.zeros((1, G), jnp.float32)
            # Key-slab loop: exp on the EUP, accumulation on the VPU (+ one
            # cross-sublane reduce per slab).  The full (G, G) matrix and the
            # tiny-M MXU contraction of the previous version are gone.
            for j0 in range(0, G, TK):
                kt_s = kt_b[j0:j0 + TK, :]                         # (TK, 1)
                vt_s = vt_b[j0:j0 + TK, :]                         # (TK, 1)
                e_s = jnp.exp(kt_s * q_b - m_b)                    # (TK, G)
                num = num + jnp.sum(e_s * vt_s, axis=0, keepdims=True)
                den = den + jnp.sum(e_s, axis=0, keepdims=True)
            num_rows.append(num)
            den_rows.append(den)
        num_all = jnp.concatenate(num_rows, axis=0)    # (TB, G)
        den_all = jnp.concatenate(den_rows, axis=0)    # (TB, G)

        # mask_softmax_self semantics: zero the diagonal AFTER softmax,
        # do NOT renormalize.
        out_h = (num_all - e_diag * v) / den_all       # (TB, G)

        # Fused "concat heads then matmul with W_0": acc += out_h * W_0[h].
        acc = acc + out_h * w0_ref[h]
    o_ref[...] = acc


def multiattention_forward(x, wq, wk, wv, w0):
    """x: (B, G) f32; wq/wk/wv: (H, G, 1) f32 (PyTorch layout); w0: (H,) f32.

    Returns (B, G) f32 — the mode == 0 forward of `mulitiattention`.
    """
    B, G = x.shape
    H = wq.shape[0]

    x = x.astype(jnp.float32)
    wq_l = wq[..., 0].astype(jnp.float32)          # (H, G)  lane layout
    wk_l = wk[..., 0].astype(jnp.float32)          # (H, G)
    wv_l = wv[..., 0].astype(jnp.float32)          # (H, G)
    wk_t = wk_l.T                                  # (G, H)  sublane layout
    wv_t = wv_l.T                                  # (G, H)
    w0 = w0.astype(jnp.float32)

    # Batch-tile size: fill sublanes / amortize per-step overhead when B >= 8.
    TB = B if B <= 8 else 8
    B_pad = ((B + TB - 1) // TB) * TB
    if B_pad != B:
        x = jnp.concatenate(
            [x, jnp.zeros((B_pad - B, G), jnp.float32)], axis=0)
    NB = B_pad // TB
    # Per-block transposed rows (genes on sublanes) — computed once in XLA so
    # the kernel needs no in-kernel transposes / relayouts.
    xt = x.reshape(NB, TB, G).transpose(0, 2, 1)   # (NB, G, TB)

    out = pl.pallas_call(
        _multiattention_kernel,
        out_shape=jax.ShapeDtypeStruct((B_pad, G), jnp.float32),
        grid_spec=pltpu.PrefetchScalarGridSpec(
            num_scalar_prefetch=0,
            grid=(NB,),
            in_specs=[
                pl.BlockSpec(memory_space=pltpu.MemorySpace.SMEM),  # W_0 (H,)
                pl.BlockSpec((TB, G), lambda b: (b, 0)),            # x rows
                pl.BlockSpec((1, G, TB), lambda b: (b, 0, 0)),      # x rows (transposed)
                pl.BlockSpec((H, G), lambda b: (0, 0)),             # WQ (resident)
                pl.BlockSpec((H, G), lambda b: (0, 0)),             # WK (resident)
                pl.BlockSpec((H, G), lambda b: (0, 0)),             # WV (resident)
                pl.BlockSpec((G, H), lambda b: (0, 0)),             # WK^T (resident)
                pl.BlockSpec((G, H), lambda b: (0, 0)),             # WV^T (resident)
            ],
            out_specs=pl.BlockSpec((TB, G), lambda b: (b, 0)),
        ),
        compiler_params=pltpu.CompilerParams(
            dimension_semantics=("parallel",)),   # batch tiles are independent
    )(w0, x, xt, wq_l, wk_l, wv_l, wk_t, wv_t)
    return out[:B]


def reference_forward(x, wq, wk, wv, w0):
    """Pure-JAX reference mirroring the PyTorch forward (mode == 0)."""
    B, G = x.shape
    H = wq.shape[0]
    heads = []
    for h in range(H):
        q = x * wq[h, :, 0][None, :]
        k = x * wk[h, :, 0][None, :]
        v = x * wv[h, :, 0][None, :]
        s = q[:, :, None] * k[:, None, :]                 # (B, G, G)
        z = jax.nn.softmax(s, axis=-1)
        z = z * (1.0 - jnp.eye(G, dtype=z.dtype))[None, :, :]
        heads.append(jnp.sum(z * v[:, None, :], axis=-1))
    out = jnp.stack(heads, axis=-1)        # (B, G, H)  == cat over heads on dim 2
    return jnp.sum(out * w0, axis=-1)      # matmul with W_0 -> (B, G)


if __name__ == "__main__":
    # Small, self-consistent shapes: n_gene == n_feature == G.
    B, G, H = 2, 128, 4

    key = jax.random.PRNGKey(0)
    kx, kq, kk, kv = jax.random.split(key, 4)

    x = jax.random.normal(kx, (B, G), dtype=jnp.float32)

    # Deterministic init mimicking xavier_normal_ on (H, n_feature, 1).
    std = float(np.sqrt(2.0 / (G + H)))
    wq = jax.random.normal(kq, (H, G, 1), dtype=jnp.float32) * std
    wk = jax.random.normal(kk, (H, G, 1), dtype=jnp.float32) * std
    wv = jax.random.normal(kv, (H, G, 1), dtype=jnp.float32) * std
    w0 = jnp.full((H,), 0.001, dtype=jnp.float32)          # W_0 init

    out = jax.block_until_ready(multiattention_forward(x, wq, wk, wv, w0))
    ref = reference_forward(x, wq, wk, wv, w0)

    assert out.shape == (B, G) and out.dtype == jnp.float32
    np.testing.assert_allclose(np.asarray(out), np.asarray(ref),
                               rtol=1e-4, atol=1e-6)
    print("KERNEL_OK")
</pallas_src>

<mosaic_0001>
module attributes {stable_mosaic.version = 11 : i64} {
  func.func @_multiattention_kernel(%arg0: i32, %arg1: memref<4xf32, #tpu.memory_space<smem>>, %arg2: memref<2x128xf32, #tpu.memory_space<vmem>>, %arg3: memref<1x128x2xf32, #tpu.memory_space<vmem>>, %arg4: memref<4x128xf32, #tpu.memory_space<vmem>>, %arg5: memref<4x128xf32, #tpu.memory_space<vmem>>, %arg6: memref<4x128xf32, #tpu.memory_space<vmem>>, %arg7: memref<128x4xf32, #tpu.memory_space<vmem>>, %arg8: memref<128x4xf32, #tpu.memory_space<vmem>>, %arg9: memref<2x128xf32, #tpu.memory_space<vmem>>) attributes {dimension_semantics = [#tpu.dimension_semantics<parallel>], iteration_bounds = array<i64: 1>, scalar_prefetch = 0 : i64, scratch_operands = 0 : i64, tpu.core_type = #tpu.core_type<tc>, window_params = [{transform_indices = @transform_0, window_bounds = array<i64: 4>}, {transform_indices = @transform_1, window_bounds = array<i64: 2, 128>}, {transform_indices = @transform_2, window_bounds = array<i64: 1, 128, 2>}, {pipeline_mode = #tpu.pipeline_mode<synchronous>, transform_indices = @transform_3, window_bounds = array<i64: 4, 128>}, {pipeline_mode = #tpu.pipeline_mode<synchronous>, transform_indices = @transform_4, window_bounds = array<i64: 4, 128>}, {pipeline_mode = #tpu.pipeline_mode<synchronous>, transform_indices = @transform_5, window_bounds = array<i64: 4, 128>}, {pipeline_mode = #tpu.pipeline_mode<synchronous>, transform_indices = @transform_6, window_bounds = array<i64: 128, 4>}, {pipeline_mode = #tpu.pipeline_mode<synchronous>, transform_indices = @transform_7, window_bounds = array<i64: 128, 4>}, {transform_indices = @transform_8, window_bounds = array<i64: 2, 128>}]} {
    %c0 = arith.constant 0 : index
    %c0_0 = arith.constant 0 : index
    %0 = vector.load %arg2[%c0, %c0_0] : memref<2x128xf32, #tpu.memory_space<vmem>>, vector<2x128xf32>
    %c0_1 = arith.constant 0 : index
    %c0_2 = arith.constant 0 : index
    %c0_3 = arith.constant 0 : index
    %1 = vector.load %arg3[%c0_1, %c0_2, %c0_3] : memref<1x128x2xf32, #tpu.memory_space<vmem>>, vector<1x128x2xf32>
    %2 = vector.shape_cast %1 : vector<1x128x2xf32> to vector<128x2xf32>
    %cst = arith.constant 0.000000e+00 : f32
    %3 = vector.broadcast %cst : f32 to vector<2x128xf32>
    %c0_4 = arith.constant 0 : index
    %c0_5 = arith.constant 0 : index
    %4 = vector.load %arg4[%c0_4, %c0_5] : memref<4x128xf32, #tpu.memory_space<vmem>>, vector<1x128xf32>
    %5 = vector.broadcast %4 : vector<1x128xf32> to vector<2x128xf32>
    %6 = arith.mulf %0, %5 : vector<2x128xf32>
    %c0_6 = arith.constant 0 : index
    %c0_7 = arith.constant 0 : index
    %7 = vector.load %arg5[%c0_6, %c0_7] : memref<4x128xf32, #tpu.memory_space<vmem>>, vector<1x128xf32>
    %8 = vector.broadcast %7 : vector<1x128xf32> to vector<2x128xf32>
    %9 = arith.mulf %0, %8 : vector<2x128xf32>
    %c0_8 = arith.constant 0 : index
    %c0_9 = arith.constant 0 : index
    %10 = vector.load %arg6[%c0_8, %c0_9] : memref<4x128xf32, #tpu.memory_space<vmem>>, vector<1x128xf32>
    %11 = vector.broadcast %10 : vector<1x128xf32> to vector<2x128xf32>
    %12 = arith.mulf %0, %11 : vector<2x128xf32>
    %c0_10 = arith.constant 0 : index
    %c0_11 = arith.constant 0 : index
    %13 = vector.load %arg7[%c0_10, %c0_11] : memref<128x4xf32, #tpu.memory_space<vmem>>, vector<128x1xf32>
    %14 = vector.broadcast %13 : vector<128x1xf32> to vector<128x2xf32>
    %15 = arith.mulf %2, %14 : vector<128x2xf32>
    %c0_12 = arith.constant 0 : index
    %c0_13 = arith.constant 0 : index
    %16 = vector.load %arg8[%c0_12, %c0_13] : memref<128x4xf32, #tpu.memory_space<vmem>>, vector<128x1xf32>
    %17 = vector.broadcast %16 : vector<128x1xf32> to vector<128x2xf32>
    %18 = arith.mulf %2, %17 : vector<128x2xf32>
    %cst_14 = arith.constant dense<0xFF800000> : vector<2xf32>
    %19 = vector.multi_reduction <maximumf>, %9, %cst_14 [1] : vector<2x128xf32> to vector<2xf32>
    %20 = vector.shape_cast %19 : vector<2xf32> to vector<2x1xf32>
    %cst_15 = arith.constant dense<0x7F800000> : vector<2xf32>
    %21 = vector.multi_reduction <minimumf>, %9, %cst_15 [1] : vector<2x128xf32> to vector<2xf32>
    %22 = vector.shape_cast %21 : vector<2xf32> to vector<2x1xf32>
    %cst_16 = arith.constant 0.000000e+00 : f32
    %23 = vector.broadcast %cst_16 : f32 to vector<2x128xf32>
    %24 = arith.cmpf oge, %6, %23 : vector<2x128xf32>
    %25 = vector.broadcast %20 : vector<2x1xf32> to vector<2x128xf32>
    %26 = arith.mulf %6, %25 : vector<2x128xf32>
    %27 = vector.broadcast %22 : vector<2x1xf32> to vector<2x128xf32>
    %28 = arith.mulf %6, %27 : vector<2x128xf32>
    %29 = arith.select %24, %26, %28 : vector<2x128xi1>, vector<2x128xf32>
    %30 = arith.mulf %6, %9 : vector<2x128xf32>
    %31 = arith.subf %30, %29 : vector<2x128xf32>
    %32 = math.exp %31 : vector<2x128xf32>
    %33 = vector.extract_strided_slice %6 {offsets = [0, 0], sizes = [1, 128], strides = [1, 1]} : vector<2x128xf32> to vector<1x128xf32>
    %34 = vector.extract_strided_slice %29 {offsets = [0, 0], sizes = [1, 128], strides = [1, 1]} : vector<2x128xf32> to vector<1x128xf32>
    %35 = vector.extract_strided_slice %15 {offsets = [0, 0], sizes = [128, 1], strides = [1, 1]} : vector<128x2xf32> to vector<128x1xf32>
    %36 = vector.extract_strided_slice %18 {offsets = [0, 0], sizes = [128, 1], strides = [1, 1]} : vector<128x2xf32> to vector<128x1xf32>
    %cst_17 = arith.constant 0.000000e+00 : f32
    %37 = vector.broadcast %cst_17 : f32 to vector<1x128xf32>
    %cst_18 = arith.constant 0.000000e+00 : f32
    %38 = vector.broadcast %cst_18 : f32 to vector<1x128xf32>
    %39 = vector.broadcast %35 : vector<128x1xf32> to vector<128x128xf32>
    %40 = vector.broadcast %33 : vector<1x128xf32> to vector<128x128xf32>
    %41 = arith.mulf %39, %40 : vector<128x128xf32>
    %42 = vector.broadcast %34 : vector<1x128xf32> to vector<128x128xf32>
    %43 = arith.subf %41, %42 : vector<128x128xf32>
    %44 = math.exp %43 : vector<128x128xf32>
    %45 = vector.broadcast %36 : vector<128x1xf32> to vector<128x128xf32>
    %46 = arith.mulf %44, %45 : vector<128x128xf32>
    %cst_19 = arith.constant dense<0.000000e+00> : vector<128xf32>
    %47 = vector.multi_reduction <add>, %46, %cst_19 [0] : vector<128x128xf32> to vector<128xf32>
    %48 = vector.shape_cast %47 : vector<128xf32> to vector<1x128xf32>
    %49 = arith.addf %37, %48 : vector<1x128xf32>
    %cst_20 = arith.constant dense<0.000000e+00> : vector<128xf32>
    %50 = vector.multi_reduction <add>, %44, %cst_20 [0] : vector<128x128xf32> to vector<128xf32>
    %51 = vector.shape_cast %50 : vector<128xf32> to vector<1x128xf32>
    %52 = arith.addf %38, %51 : vector<1x128xf32>
    %53 = vector.extract_strided_slice %6 {offsets = [1, 0], sizes = [1, 128], strides = [1, 1]} : vector<2x128xf32> to vector<1x128xf32>
    %54 = vector.extract_strided_slice %29 {offsets = [1, 0], sizes = [1, 128], strides = [1, 1]} : vector<2x128xf32> to vector<1x128xf32>
    %55 = vector.extract_strided_slice %15 {offsets = [0, 1], sizes = [128, 1], strides = [1, 1]} : vector<128x2xf32> to vector<128x1xf32>
    %56 = vector.extract_strided_slice %18 {offsets = [0, 1], sizes = [128, 1], strides = [1, 1]} : vector<128x2xf32> to vector<128x1xf32>
    %cst_21 = arith.constant 0.000000e+00 : f32
    %57 = vector.broadcast %cst_21 : f32 to vector<1x128xf32>
    %cst_22 = arith.constant 0.000000e+00 : f32
    %58 = vector.broadcast %cst_22 : f32 to vector<1x128xf32>
    %59 = vector.broadcast %55 : vector<128x1xf32> to vector<128x128xf32>
    %60 = vector.broadcast %53 : vector<1x128xf32> to vector<128x128xf32>
    %61 = arith.mulf %59, %60 : vector<128x128xf32>
    %62 = vector.broadcast %54 : vector<1x128xf32> to vector<128x128xf32>
    %63 = arith.subf %61, %62 : vector<128x128xf32>
    %64 = math.exp %63 : vector<128x128xf32>
    %65 = vector.broadcast %56 : vector<128x1xf32> to vector<128x128xf32>
    %66 = arith.mulf %64, %65 : vector<128x128xf32>
    %cst_23 = arith.constant dense<0.000000e+00> : vector<128xf32>
    %67 = vector.multi_reduction <add>, %66, %cst_23 [0] : vector<128x128xf32> to vector<128xf32>
    %68 = vector.shape_cast %67 : vector<128xf32> to vector<1x128xf32>
    %69 = arith.addf %57, %68 : vector<1x128xf32>
    %cst_24 = arith.constant dense<0.000000e+00> : vector<128xf32>
    %70 = vector.multi_reduction <add>, %64, %cst_24 [0] : vector<128x128xf32> to vector<128xf32>
    %71 = vector.shape_cast %70 : vector<128xf32> to vector<1x128xf32>
    %72 = arith.addf %58, %71 : vector<1x128xf32>
    %73 = tpu.concatenate %49, %69 in 0 : vector<1x128xf32>, vector<1x128xf32> -> vector<2x128xf32>
    %74 = tpu.concatenate %52, %72 in 0 : vector<1x128xf32>, vector<1x128xf32> -> vector<2x128xf32>
    %75 = arith.mulf %32, %12 : vector<2x128xf32>
    %76 = arith.subf %73, %75 : vector<2x128xf32>
    %77 = arith.divf %76, %74 : vector<2x128xf32>
    %c0_25 = arith.constant 0 : index
    %78 = memref.load %arg1[%c0_25] : memref<4xf32, #tpu.memory_space<smem>>
    %79 = vector.broadcast %78 : f32 to vector<2x128xf32>
    %80 = arith.mulf %77, %79 : vector<2x128xf32>
    %81 = arith.addf %3, %80 : vector<2x128xf32>
    %c1 = arith.constant 1 : index
    %c0_26 = arith.constant 0 : index
    %82 = vector.load %arg4[%c1, %c0_26] : memref<4x128xf32, #tpu.memory_space<vmem>>, vector<1x128xf32>
    %83 = vector.broadcast %82 : vector<1x128xf32> to vector<2x128xf32>
    %84 = arith.mulf %0, %83 : vector<2x128xf32>
    %c1_27 = arith.constant 1 : index
    %c0_28 = arith.constant 0 : index
    %85 = vector.load %arg5[%c1_27, %c0_28] : memref<4x128xf32, #tpu.memory_space<vmem>>, vector<1x128xf32>
    %86 = vector.broadcast %85 : vector<1x128xf32> to vector<2x128xf32>
    %87 = arith.mulf %0, %86 : vector<2x128xf32>
    %c1_29 = arith.constant 1 : index
    %c0_30 = arith.constant 0 : index
    %88 = vector.load %arg6[%c1_29, %c0_30] : memref<4x128xf32, #tpu.memory_space<vmem>>, vector<1x128xf32>
    %89 = vector.broadcast %88 : vector<1x128xf32> to vector<2x128xf32>
    %90 = arith.mulf %0, %89 : vector<2x128xf32>
    %c0_31 = arith.constant 0 : index
    %c1_32 = arith.constant 1 : index
    %91 = vector.load %arg7[%c0_31, %c1_32] : memref<128x4xf32, #tpu.memory_space<vmem>>, vector<128x1xf32>
    %92 = vector.broadcast %91 : vector<128x1xf32> to vector<128x2xf32>
    %93 = arith.mulf %2, %92 : vector<128x2xf32>
    %c0_33 = arith.constant 0 : index
    %c1_34 = arith.constant 1 : index
    %94 = vector.load %arg8[%c0_33, %c1_34] : memref<128x4xf32, #tpu.memory_space<vmem>>, vector<128x1xf32>
    %95 = vector.broadcast %94 : vector<128x1xf32> to vector<128x2xf32>
    %96 = arith.mulf %2, %95 : vector<128x2xf32>
    %cst_35 = arith.constant dense<0xFF800000> : vector<2xf32>
    %97 = vector.multi_reduction <maximumf>, %87, %cst_35 [1] : vector<2x128xf32> to vector<2xf32>
    %98 = vector.shape_cast %97 : vector<2xf32> to vector<2x1xf32>
    %cst_36 = arith.constant dense<0x7F800000> : vector<2xf32>
    %99 = vector.multi_reduction <minimumf>, %87, %cst_36 [1] : vector<2x128xf32> to vector<2xf32>
    %100 = vector.shape_cast %99 : vector<2xf32> to vector<2x1xf32>
    %cst_37 = arith.constant 0.000000e+00 : f32
    %101 = vector.broadcast %cst_37 : f32 to vector<2x128xf32>
    %102 = arith.cmpf oge, %84, %101 : vector<2x128xf32>
    %103 = vector.broadcast %98 : vector<2x1xf32> to vector<2x128xf32>
    %104 = arith.mulf %84, %103 : vector<2x128xf32>
    %105 = vector.broadcast %100 : vector<2x1xf32> to vector<2x128xf32>
    %106 = arith.mulf %84, %105 : vector<2x128xf32>
    %107 = arith.select %102, %104, %106 : vector<2x128xi1>, vector<2x128xf32>
    %108 = arith.mulf %84, %87 : vector<2x128xf32>
    %109 = arith.subf %108, %107 : vector<2x128xf32>
    %110 = math.exp %109 : vector<2x128xf32>
    %111 = vector.extract_strided_slice %84 {offsets = [0, 0], sizes = [1, 128], strides = [1, 1]} : vector<2x128xf32> to vector<1x128xf32>
    %112 = vector.extract_strided_slice %107 {offsets = [0, 0], sizes = [1, 128], strides = [1, 1]} : vector<2x128xf32> to vector<1x128xf32>
    %113 = vector.extract_strided_slice %93 {offsets = [0, 0], sizes = [128, 1], strides = [1, 1]} : vector<128x2xf32> to vector<128x1xf32>
    %114 = vector.extract_strided_slice %96 {offsets = [0, 0], sizes = [128, 1], strides = [1, 1]} : vector<128x2xf32> to vector<128x1xf32>
    %cst_38 = arith.constant 0.000000e+00 : f32
    %115 = vector.broadcast %cst_38 : f32 to vector<1x128xf32>
    %cst_39 = arith.constant 0.000000e+00 : f32
    %116 = vector.broadcast %cst_39 : f32 to vector<1x128xf32>
    %117 = vector.broadcast %113 : vector<128x1xf32> to vector<128x128xf32>
    %118 = vector.broadcast %111 : vector<1x128xf32> to vector<128x128xf32>
    %119 = arith.mulf %117, %118 : vector<128x128xf32>
    %120 = vector.broadcast %112 : vector<1x128xf32> to vector<128x128xf32>
    %121 = arith.subf %119, %120 : vector<128x128xf32>
    %122 = math.exp %121 : vector<128x128xf32>
    %123 = vector.broadcast %114 : vector<128x1xf32> to vector<128x128xf32>
    %124 = arith.mulf %122, %123 : vector<128x128xf32>
    %cst_40 = arith.constant dense<0.000000e+00> : vector<128xf32>
    %125 = vector.multi_reduction <add>, %124, %cst_40 [0] : vector<128x128xf32> to vector<128xf32>
    %126 = vector.shape_cast %125 : vector<128xf32> to vector<1x128xf32>
    %127 = arith.addf %115, %126 : vector<1x128xf32>
    %cst_41 = arith.constant dense<0.000000e+00> : vector<128xf32>
    %128 = vector.multi_reduction <add>, %122, %cst_41 [0] : vector<128x128xf32> to vector<128xf32>
    %129 = vector.shape_cast %128 : vector<128xf32> to vector<1x128xf32>
    %130 = arith.addf %116, %129 : vector<1x128xf32>
    %131 = vector.extract_strided_slice %84 {offsets = [1, 0], sizes = [1, 128], strides = [1, 1]} : vector<2x128xf32> to vector<1x128xf32>
    %132 = vector.extract_strided_slice %107 {offsets = [1, 0], sizes = [1, 128], strides = [1, 1]} : vector<2x128xf32> to vector<1x128xf32>
    %133 = vector.extract_strided_slice %93 {offsets = [0, 1], sizes = [128, 1], strides = [1, 1]} : vector<128x2xf32> to vector<128x1xf32>
    %134 = vector.extract_strided_slice %96 {offsets = [0, 1], sizes = [128, 1], strides = [1, 1]} : vector<128x2xf32> to vector<128x1xf32>
    %cst_42 = arith.constant 0.000000e+00 : f32
    %135 = vector.broadcast %cst_42 : f32 to vector<1x128xf32>
    %cst_43 = arith.constant 0.000000e+00 : f32
    %136 = vector.broadcast %cst_43 : f32 to vector<1x128xf32>
    %137 = vector.broadcast %133 : vector<128x1xf32> to vector<128x128xf32>
    %138 = vector.broadcast %131 : vector<1x128xf32> to vector<128x128xf32>
    %139 = arith.mulf %137, %138 : vector<128x128xf32>
    %140 = vector.broadcast %132 : vector<1x128xf32> to vector<128x128xf32>
    %141 = arith.subf %139, %140 : vector<128x128xf32>
    %142 = math.exp %141 : vector<128x128xf32>
    %143 = vector.broadcast %134 : vector<128x1xf32> to vector<128x128xf32>
    %144 = arith.mulf %142, %143 : vector<128x128xf32>
    %cst_44 = arith.constant dense<0.000000e+00> : vector<128xf32>
    %145 = vector.multi_reduction <add>, %144, %cst_44 [0] : vector<128x128xf32> to vector<128xf32>
    %146 = vector.shape_cast %145 : vector<128xf32> to vector<1x128xf32>
    %147 = arith.addf %135, %146 : vector<1x128xf32>
    %cst_45 = arith.constant dense<0.000000e+00> : vector<128xf32>
    %148 = vector.multi_reduction <add>, %142, %cst_45 [0] : vector<128x128xf32> to vector<128xf32>
    %149 = vector.shape_cast %148 : vector<128xf32> to vector<1x128xf32>
    %150 = arith.addf %136, %149 : vector<1x128xf32>
    %151 = tpu.concatenate %127, %147 in 0 : vector<1x128xf32>, vector<1x128xf32> -> vector<2x128xf32>
    %152 = tpu.concatenate %130, %150 in 0 : vector<1x128xf32>, vector<1x128xf32> -> vector<2x128xf32>
    %153 = arith.mulf %110, %90 : vector<2x128xf32>
    %154 = arith.subf %151, %153 : vector<2x128xf32>
    %155 = arith.divf %154, %152 : vector<2x128xf32>
    %c1_46 = arith.constant 1 : index
    %156 = memref.load %arg1[%c1_46] : memref<4xf32, #tpu.memory_space<smem>>
    %157 = vector.broadcast %156 : f32 to vector<2x128xf32>
    %158 = arith.mulf %155, %157 : vector<2x128xf32>
    %159 = arith.addf %81, %158 : vector<2x128xf32>
    %c2 = arith.constant 2 : index
    %c0_47 = arith.constant 0 : index
    %160 = vector.load %arg4[%c2, %c0_47] : memref<4x128xf32, #tpu.memory_space<vmem>>, vector<1x128xf32>
    %161 = vector.broadcast %160 : vector<1x128xf32> to vector<2x128xf32>
    %162 = arith.mulf %0, %161 : vector<2x128xf32>
    %c2_48 = arith.constant 2 : index
    %c0_49 = arith.constant 0 : index
    %163 = vector.load %arg5[%c2_48, %c0_49] : memref<4x128xf32, #tpu.memory_space<vmem>>, vector<1x128xf32>
    %164 = vector.broadcast %163 : vector<1x128xf32> to vector<2x128xf32>
    %165 = arith.mulf %0, %164 : vector<2x128xf32>
    %c2_50 = arith.constant 2 : index
    %c0_51 = arith.constant 0 : index
    %166 = vector.load %arg6[%c2_50, %c0_51] : memref<4x128xf32, #tpu.memory_space<vmem>>, vector<1x128xf32>
    %167 = vector.broadcast %166 : vector<1x128xf32> to vector<2x128xf32>
    %168 = arith.mulf %0, %167 : vector<2x128xf32>
    %c0_52 = arith.constant 0 : index
    %c2_53 = arith.constant 2 : index
    %169 = vector.load %arg7[%c0_52, %c2_53] : memref<128x4xf32, #tpu.memory_space<vmem>>, vector<128x1xf32>
    %170 = vector.broadcast %169 : vector<128x1xf32> to vector<128x2xf32>
    %171 = arith.mulf %2, %170 : vector<128x2xf32>
    %c0_54 = arith.constant 0 : index
    %c2_55 = arith.constant 2 : index
    %172 = vector.load %arg8[%c0_54, %c2_55] : memref<128x4xf32, #tpu.memory_space<vmem>>, vector<128x1xf32>
    %173 = vector.broadcast %172 : vector<128x1xf32> to vector<128x2xf32>
    %174 = arith.mulf %2, %173 : vector<128x2xf32>
    %cst_56 = arith.constant dense<0xFF800000> : vector<2xf32>
    %175 = vector.multi_reduction <maximumf>, %165, %cst_56 [1] : vector<2x128xf32> to vector<2xf32>
    %176 = vector.shape_cast %175 : vector<2xf32> to vector<2x1xf32>
    %cst_57 = arith.constant dense<0x7F800000> : vector<2xf32>
    %177 = vector.multi_reduction <minimumf>, %165, %cst_57 [1] : vector<2x128xf32> to vector<2xf32>
    %178 = vector.shape_cast %177 : vector<2xf32> to vector<2x1xf32>
    %cst_58 = arith.constant 0.000000e+00 : f32
    %179 = vector.broadcast %cst_58 : f32 to vector<2x128xf32>
    %180 = arith.cmpf oge, %162, %179 : vector<2x128xf32>
    %181 = vector.broadcast %176 : vector<2x1xf32> to vector<2x128xf32>
    %182 = arith.mulf %162, %181 : vector<2x128xf32>
    %183 = vector.broadcast %178 : vector<2x1xf32> to vector<2x128xf32>
    %184 = arith.mulf %162, %183 : vector<2x128xf32>
    %185 = arith.select %180, %182, %184 : vector<2x128xi1>, vector<2x128xf32>
    %186 = arith.mulf %162, %165 : vector<2x128xf32>
    %187 = arith.subf %186, %185 : vector<2x128xf32>
    %188 = math.exp %187 : vector<2x128xf32>
    %189 = vector.extract_strided_slice %162 {offsets = [0, 0], sizes = [1, 128], strides = [1, 1]} : vector<2x128xf32> to vector<1x128xf32>
    %190 = vector.extract_strided_slice %185 {offsets = [0, 0], sizes = [1, 128], strides = [1, 1]} : vector<2x128xf32> to vector<1x128xf32>
    %191 = vector.extract_strided_slice %171 {offsets = [0, 0], sizes = [128, 1], strides = [1, 1]} : vector<128x2xf32> to vector<128x1xf32>
    %192 = vector.extract_strided_slice %174 {offsets = [0, 0], sizes = [128, 1], strides = [1, 1]} : vector<128x2xf32> to vector<128x1xf32>
    %cst_59 = arith.constant 0.000000e+00 : f32
    %193 = vector.broadcast %cst_59 : f32 to vector<1x128xf32>
    %cst_60 = arith.constant 0.000000e+00 : f32
    %194 = vector.broadcast %cst_60 : f32 to vector<1x128xf32>
    %195 = vector.broadcast %191 : vector<128x1xf32> to vector<128x128xf32>
    %196 = vector.broadcast %189 : vector<1x128xf32> to vector<128x128xf32>
    %197 = arith.mulf %195, %196 : vector<128x128xf32>
    %198 = vector.broadcast %190 : vector<1x128xf32> to vector<128x128xf32>
    %199 = arith.subf %197, %198 : vector<128x128xf32>
    %200 = math.exp %199 : vector<128x128xf32>
    %201 = vector.broadcast %192 : vector<128x1xf32> to vector<128x128xf32>
    %202 = arith.mulf %200, %201 : vector<128x128xf32>
    %cst_61 = arith.constant dense<0.000000e+00> : vector<128xf32>
    %203 = vector.multi_reduction <add>, %202, %cst_61 [0] : vector<128x128xf32> to vector<128xf32>
    %204 = vector.shape_cast %203 : vector<128xf32> to vector<1x128xf32>
    %205 = arith.addf %193, %204 : vector<1x128xf32>
    %cst_62 = arith.constant dense<0.000000e+00> : vector<128xf32>
    %206 = vector.multi_reduction <add>, %200, %cst_62 [0] : vector<128x128xf32> to vector<128xf32>
    %207 = vector.shape_cast %206 : vector<128xf32> to vector<1x128xf32>
    %208 = arith.addf %194, %207 : vector<1x128xf32>
    %209 = vector.extract_strided_slice %162 {offsets = [1, 0], sizes = [1, 128], strides = [1, 1]} : vector<2x128xf32> to vector<1x128xf32>
    %210 = vector.extract_strided_slice %185 {offsets = [1, 0], sizes = [1, 128], strides = [1, 1]} : vector<2x128xf32> to vector<1x128xf32>
    %211 = vector.extract_strided_slice %171 {offsets = [0, 1], sizes = [128, 1], strides = [1, 1]} : vector<128x2xf32> to vector<128x1xf32>
    %212 = vector.extract_strided_slice %174 {offsets = [0, 1], sizes = [128, 1], strides = [1, 1]} : vector<128x2xf32> to vector<128x1xf32>
    %cst_63 = arith.constant 0.000000e+00 : f32
    %213 = vector.broadcast %cst_63 : f32 to vector<1x128xf32>
    %cst_64 = arith.constant 0.000000e+00 : f32
    %214 = vector.broadcast %cst_64 : f32 to vector<1x128xf32>
    %215 = vector.broadcast %211 : vector<128x1xf32> to vector<128x128xf32>
    %216 = vector.broadcast %209 : vector<1x128xf32> to vector<128x128xf32>
    %217 = arith.mulf %215, %216 : vector<128x128xf32>
    %218 = vector.broadcast %210 : vector<1x128xf32> to vector<128x128xf32>
    %219 = arith.subf %217, %218 : vector<128x128xf32>
    %220 = math.exp %219 : vector<128x128xf32>
    %221 = vector.broadcast %212 : vector<128x1xf32> to vector<128x128xf32>
    %222 = arith.mulf %220, %221 : vector<128x128xf32>
    %cst_65 = arith.constant dense<0.000000e+00> : vector<128xf32>
    %223 = vector.multi_reduction <add>, %222, %cst_65 [0] : vector<128x128xf32> to vector<128xf32>
    %224 = vector.shape_cast %223 : vector<128xf32> to vector<1x128xf32>
    %225 = arith.addf %213, %224 : vector<1x128xf32>
    %cst_66 = arith.constant dense<0.000000e+00> : vector<128xf32>
    %226 = vector.multi_reduction <add>, %220, %cst_66 [0] : vector<128x128xf32> to vector<128xf32>
    %227 = vector.shape_cast %226 : vector<128xf32> to vector<1x128xf32>
    %228 = arith.addf %214, %227 : vector<1x128xf32>
    %229 = tpu.concatenate %205, %225 in 0 : vector<1x128xf32>, vector<1x128xf32> -> vector<2x128xf32>
    %230 = tpu.concatenate %208, %228 in 0 : vector<1x128xf32>, vector<1x128xf32> -> vector<2x128xf32>
    %231 = arith.mulf %188, %168 : vector<2x128xf32>
    %232 = arith.subf %229, %231 : vector<2x128xf32>
    %233 = arith.divf %232, %230 : vector<2x128xf32>
    %c2_67 = arith.constant 2 : index
    %234 = memref.load %arg1[%c2_67] : memref<4xf32, #tpu.memory_space<smem>>
    %235 = vector.broadcast %234 : f32 to vector<2x128xf32>
    %236 = arith.mulf %233, %235 : vector<2x128xf32>
    %237 = arith.addf %159, %236 : vector<2x128xf32>
    %c3 = arith.constant 3 : index
    %c0_68 = arith.constant 0 : index
    %238 = vector.load %arg4[%c3, %c0_68] : memref<4x128xf32, #tpu.memory_space<vmem>>, vector<1x128xf32>
    %239 = vector.broadcast %238 : vector<1x128xf32> to vector<2x128xf32>
    %240 = arith.mulf %0, %239 : vector<2x128xf32>
    %c3_69 = arith.constant 3 : index
    %c0_70 = arith.constant 0 : index
    %241 = vector.load %arg5[%c3_69, %c0_70] : memref<4x128xf32, #tpu.memory_space<vmem>>, vector<1x128xf32>
    %242 = vector.broadcast %241 : vector<1x128xf32> to vector<2x128xf32>
    %243 = arith.mulf %0, %242 : vector<2x128xf32>
    %c3_71 = arith.constant 3 : index
    %c0_72 = arith.constant 0 : index
    %244 = vector.load %arg6[%c3_71, %c0_72] : memref<4x128xf32, #tpu.memory_space<vmem>>, vector<1x128xf32>
    %245 = vector.broadcast %244 : vector<1x128xf32> to vector<2x128xf32>
    %246 = arith.mulf %0, %245 : vector<2x128xf32>
    %c0_73 = arith.constant 0 : index
    %c3_74 = arith.constant 3 : index
    %247 = vector.load %arg7[%c0_73, %c3_74] : memref<128x4xf32, #tpu.memory_space<vmem>>, vector<128x1xf32>
    %248 = vector.broadcast %247 : vector<128x1xf32> to vector<128x2xf32>
    %249 = arith.mulf %2, %248 : vector<128x2xf32>
    %c0_75 = arith.constant 0 : index
    %c3_76 = arith.constant 3 : index
    %250 = vector.load %arg8[%c0_75, %c3_76] : memref<128x4xf32, #tpu.memory_space<vmem>>, vector<128x1xf32>
    %251 = vector.broadcast %250 : vector<128x1xf32> to vector<128x2xf32>
    %252 = arith.mulf %2, %251 : vector<128x2xf32>
    %cst_77 = arith.constant dense<0xFF800000> : vector<2xf32>
    %253 = vector.multi_reduction <maximumf>, %243, %cst_77 [1] : vector<2x128xf32> to vector<2xf32>
    %254 = vector.shape_cast %253 : vector<2xf32> to vector<2x1xf32>
    %cst_78 = arith.constant dense<0x7F800000> : vector<2xf32>
    %255 = vector.multi_reduction <minimumf>, %243, %cst_78 [1] : vector<2x128xf32> to vector<2xf32>
    %256 = vector.shape_cast %255 : vector<2xf32> to vector<2x1xf32>
    %cst_79 = arith.constant 0.000000e+00 : f32
    %257 = vector.broadcast %cst_79 : f32 to vector<2x128xf32>
    %258 = arith.cmpf oge, %240, %257 : vector<2x128xf32>
    %259 = vector.broadcast %254 : vector<2x1xf32> to vector<2x128xf32>
    %260 = arith.mulf %240, %259 : vector<2x128xf32>
    %261 = vector.broadcast %256 : vector<2x1xf32> to vector<2x128xf32>
    %262 = arith.mulf %240, %261 : vector<2x128xf32>
    %263 = arith.select %258, %260, %262 : vector<2x128xi1>, vector<2x128xf32>
    %264 = arith.mulf %240, %243 : vector<2x128xf32>
    %265 = arith.subf %264, %263 : vector<2x128xf32>
    %266 = math.exp %265 : vector<2x128xf32>
    %267 = vector.extract_strided_slice %240 {offsets = [0, 0], sizes = [1, 128], strides = [1, 1]} : vector<2x128xf32> to vector<1x128xf32>
    %268 = vector.extract_strided_slice %263 {offsets = [0, 0], sizes = [1, 128], strides = [1, 1]} : vector<2x128xf32> to vector<1x128xf32>
    %269 = vector.extract_strided_slice %249 {offsets = [0, 0], sizes = [128, 1], strides = [1, 1]} : vector<128x2xf32> to vector<128x1xf32>
    %270 = vector.extract_strided_slice %252 {offsets = [0, 0], sizes = [128, 1], strides = [1, 1]} : vector<128x2xf32> to vector<128x1xf32>
    %cst_80 = arith.constant 0.000000e+00 : f32
    %271 = vector.broadcast %cst_80 : f32 to vector<1x128xf32>
    %cst_81 = arith.constant 0.000000e+00 : f32
    %272 = vector.broadcast %cst_81 : f32 to vector<1x128xf32>
    %273 = vector.broadcast %269 : vector<128x1xf32> to vector<128x128xf32>
    %274 = vector.broadcast %267 : vector<1x128xf32> to vector<128x128xf32>
    %275 = arith.mulf %273, %274 : vector<128x128xf32>
    %276 = vector.broadcast %268 : vector<1x128xf32> to vector<128x128xf32>
    %277 = arith.subf %275, %276 : vector<128x128xf32>
    %278 = math.exp %277 : vector<128x128xf32>
    %279 = vector.broadcast %270 : vector<128x1xf32> to vector<128x128xf32>
    %280 = arith.mulf %278, %279 : vector<128x128xf32>
    %cst_82 = arith.constant dense<0.000000e+00> : vector<128xf32>
    %281 = vector.multi_reduction <add>, %280, %cst_82 [0] : vector<128x128xf32> to vector<128xf32>
    %282 = vector.shape_cast %281 : vector<128xf32> to vector<1x128xf32>
    %283 = arith.addf %271, %282 : vector<1x128xf32>
    %cst_83 = arith.constant dense<0.000000e+00> : vector<128xf32>
    %284 = vector.multi_reduction <add>, %278, %cst_83 [0] : vector<128x128xf32> to vector<128xf32>
    %285 = vector.shape_cast %284 : vector<128xf32> to vector<1x128xf32>
    %286 = arith.addf %272, %285 : vector<1x128xf32>
    %287 = vector.extract_strided_slice %240 {offsets = [1, 0], sizes = [1, 128], strides = [1, 1]} : vector<2x128xf32> to vector<1x128xf32>
    %288 = vector.extract_strided_slice %263 {offsets = [1, 0], sizes = [1, 128], strides = [1, 1]} : vector<2x128xf32> to vector<1x128xf32>
    %289 = vector.extract_strided_slice %249 {offsets = [0, 1], sizes = [128, 1], strides = [1, 1]} : vector<128x2xf32> to vector<128x1xf32>
    %290 = vector.extract_strided_slice %252 {offsets = [0, 1], sizes = [128, 1], strides = [1, 1]} : vector<128x2xf32> to vector<128x1xf32>
    %cst_84 = arith.constant 0.000000e+00 : f32
    %291 = vector.broadcast %cst_84 : f32 to vector<1x128xf32>
    %cst_85 = arith.constant 0.000000e+00 : f32
    %292 = vector.broadcast %cst_85 : f32 to vector<1x128xf32>
    %293 = vector.broadcast %289 : vector<128x1xf32> to vector<128x128xf32>
    %294 = vector.broadcast %287 : vector<1x128xf32> to vector<128x128xf32>
    %295 = arith.mulf %293, %294 : vector<128x128xf32>
    %296 = vector.broadcast %288 : vector<1x128xf32> to vector<128x128xf32>
    %297 = arith.subf %295, %296 : vector<128x128xf32>
    %298 = math.exp %297 : vector<128x128xf32>
    %299 = vector.broadcast %290 : vector<128x1xf32> to vector<128x128xf32>
    %300 = arith.mulf %298, %299 : vector<128x128xf32>
    %cst_86 = arith.constant dense<0.000000e+00> : vector<128xf32>
    %301 = vector.multi_reduction <add>, %300, %cst_86 [0] : vector<128x128xf32> to vector<128xf32>
    %302 = vector.shape_cast %301 : vector<128xf32> to vector<1x128xf32>
    %303 = arith.addf %291, %302 : vector<1x128xf32>
    %cst_87 = arith.constant dense<0.000000e+00> : vector<128xf32>
    %304 = vector.multi_reduction <add>, %298, %cst_87 [0] : vector<128x128xf32> to vector<128xf32>
    %305 = vector.shape_cast %304 : vector<128xf32> to vector<1x128xf32>
    %306 = arith.addf %292, %305 : vector<1x128xf32>
    %307 = tpu.concatenate %283, %303 in 0 : vector<1x128xf32>, vector<1x128xf32> -> vector<2x128xf32>
    %308 = tpu.concatenate %286, %306 in 0 : vector<1x128xf32>, vector<1x128xf32> -> vector<2x128xf32>
    %309 = arith.mulf %266, %246 : vector<2x128xf32>
    %310 = arith.subf %307, %309 : vector<2x128xf32>
    %311 = arith.divf %310, %308 : vector<2x128xf32>
    %c3_88 = arith.constant 3 : index
    %312 = memref.load %arg1[%c3_88] : memref<4xf32, #tpu.memory_space<smem>>
    %313 = vector.broadcast %312 : f32 to vector<2x128xf32>
    %314 = arith.mulf %311, %313 : vector<2x128xf32>
    %315 = arith.addf %237, %314 : vector<2x128xf32>
    %c0_89 = arith.constant 0 : index
    %c0_90 = arith.constant 0 : index
    %316 = vector.load %arg9[%c0_89, %c0_90] : memref<2x128xf32, #tpu.memory_space<vmem>>, vector<2x128xf32>
    tpu.vector_store %arg9[%c0_89, %c0_90], %315 {strides = array<i32>} : memref<2x128xf32, #tpu.memory_space<vmem>>, vector<2x128xf32>,
    return
  }
  func.func @transform_0(%arg0: i32) -> i32 {
    %c0_i32 = arith.constant 0 : i32
    %c0_i32_0 = arith.constant 0 : i32
    return %c0_i32 : i32
  }
  func.func @transform_1(%arg0: i32) -> (i32, i32) {
    %c0_i32 = arith.constant 0 : i32
    %c0_i32_0 = arith.constant 0 : i32
    return %arg0, %c0_i32 : i32, i32
  }
  func.func @transform_2(%arg0: i32) -> (i32, i32, i32) {
    %c0_i32 = arith.constant 0 : i32
    %c0_i32_0 = arith.constant 0 : i32
    %c0_i32_1 = arith.constant 0 : i32
    return %arg0, %c0_i32, %c0_i32_0 : i32, i32, i32
  }
  func.func @transform_3(%arg0: i32) -> (i32, i32) {
    %c0_i32 = arith.constant 0 : i32
    %c0_i32_0 = arith.constant 0 : i32
    %c0_i32_1 = arith.constant 0 : i32
    return %c0_i32, %c0_i32_0 : i32, i32
  }
  func.func @transform_4(%arg0: i32) -> (i32, i32) {
    %c0_i32 = arith.constant 0 : i32
    %c0_i32_0 = arith.constant 0 : i32
    %c0_i32_1 = arith.constant 0 : i32
    return %c0_i32, %c0_i32_0 : i32, i32
  }
  func.func @transform_5(%arg0: i32) -> (i32, i32) {
    %c0_i32 = arith.constant 0 : i32
    %c0_i32_0 = arith.constant 0 : i32
    %c0_i32_1 = arith.constant 0 : i32
    return %c0_i32, %c0_i32_0 : i32, i32
  }
  func.func @transform_6(%arg0: i32) -> (i32, i32) {
    %c0_i32 = arith.constant 0 : i32
    %c0_i32_0 = arith.constant 0 : i32
    %c0_i32_1 = arith.constant 0 : i32
    return %c0_i32, %c0_i32_0 : i32, i32
  }
  func.func @transform_7(%arg0: i32) -> (i32, i32) {
    %c0_i32 = arith.constant 0 : i32
    %c0_i32_0 = arith.constant 0 : i32
    %c0_i32_1 = arith.constant 0 : i32
    return %c0_i32, %c0_i32_0 : i32, i32
  }
  func.func @transform_8(%arg0: i32) -> (i32, i32) {
    %c0_i32 = arith.constant 0 : i32
    %c0_i32_0 = arith.constant 0 : i32
    return %arg0, %c0_i32 : i32, i32
  }
}

</mosaic_0001>

<llo_original>
// kernel: tpu_custom_call.1
$region0: #{tpu_custom_call.1}
  #allocation0 [shape = 'u32[]', space=smem, size = 0x4, offset = 0x4, fixed_abs, tag = 'smem constant byte address 0x4 - core index']
  #allocation1 [shape = 'u32[144,128]{1,0:T(1,128)}', space=vmem, size = 0x12000, scoped, tag = 'internal scratch']
  %s0 = inlined_call_operand.vmem [shape: f32[4], index: 0, kind: input, shape index: {}]
  %s1 = inlined_call_operand.vmem [shape: f32[2,128], index: 1, kind: input, shape index: {}]
  %s2 = inlined_call_operand.vmem [shape: f32[1,128,2], index: 2, kind: input, shape index: {}]
  %s3 = inlined_call_operand.vmem [shape: f32[4,128], index: 3, kind: input, shape index: {}]
  %s4 = inlined_call_operand.vmem [shape: f32[4,128], index: 4, kind: input, shape index: {}]
  %s5 = inlined_call_operand.vmem [shape: f32[4,128], index: 5, kind: input, shape index: {}]
  %s6 = inlined_call_operand.vmem [shape: f32[128,4], index: 6, kind: input, shape index: {}]
  %s7 = inlined_call_operand.vmem [shape: f32[128,4], index: 7, kind: input, shape index: {}]
  %s8 = inlined_call_operand.hbm [shape: f32[2,128], index: 8, kind: output, shape index: {}]
  %s9 = sld [smem:[#allocation0]]
  $region46: #{tpu_custom_call.1} parent=0
    _
  %s11 = ssub.s32 1, %s9
  %s12 = scalar_select 0, %s11, %s9
  $region1: #{tpu_custom_call.1} parent=0
    #allocation2 [shape = 'u8[512]{0}', space=smem, size = 0x200, scoped, tag = 'input window, operand 0, single buffered']
    #allocation3 [shape = 's32[1]{0}', space=sflag, size = 0x4, scoped, tag = 'scoped memory for tpu_custom_call.1']
    #allocation4 [shape = 's32[1]{0}', space=sflag, size = 0x4, scoped, tag = 'scoped memory for tpu_custom_call.1']
    #allocation5 [shape = 'u8[1024]{0}', space=vmem, size = 0x400, scoped, tag = 'output window, operand 0, single buffered']
    %13 = vsyncpa [#allocation4], 0
    %14 = vsyncpa [#allocation3], 0
    // Predicated region
    $region2: #{tpu_custom_call.1} parent=1 // pred_check
      _
    $region3: #{tpu_custom_call.1} parent=1 // pred_check_branch
      %16 = sbr.rel (0) target = $region5
    $region4: #{tpu_custom_call.1} parent=1 // pred_region
      %s18 = ssub.s32 16, 16
      %19 = vsyncadd [#allocation4], %s18
      %s21 = sshll.u32 %s0, 4
      %s22 = int_to_ptr.vmem [resolvable:$true] %s21
      %24 = dma.vmem_to_smem %s22, 16, [#allocation2], [#allocation4]
    $region5: #{tpu_custom_call.1} parent=1 // pred_fallthru
      _
    // Predicated region
    $region6: #{tpu_custom_call.1} parent=1 // pred_check
      _
    $region7: #{tpu_custom_call.1} parent=1 // pred_check_branch
      %26 = sbr.rel (0) target = $region9
    $region8: #{tpu_custom_call.1} parent=1 // pred_region
      _
    $region9: #{tpu_custom_call.1} parent=1 // pred_fallthru
      _
    // Predicated region
    $region10: #{tpu_custom_call.1} parent=1 // pred_check
      _
    $region11: #{tpu_custom_call.1} parent=1 // pred_check_branch
      %28 = sbr.rel (0) target = $region13
    $region12: #{tpu_custom_call.1} parent=1 // pred_region
      _
    $region13: #{tpu_custom_call.1} parent=1 // pred_fallthru
      _
    // Predicated region
    $region14: #{tpu_custom_call.1} parent=1 // pred_check
      _
    $region15: #{tpu_custom_call.1} parent=1 // pred_check_branch
      %30 = sbr.rel (0) target = $region17
    $region16: #{tpu_custom_call.1} parent=1 // pred_region
      _
    $region17: #{tpu_custom_call.1} parent=1 // pred_fallthru
      _
    // Predicated region
    $region18: #{tpu_custom_call.1} parent=1 // pred_check
      _
    $region19: #{tpu_custom_call.1} parent=1 // pred_check_branch
      %32 = sbr.rel (0) target = $region21
    $region20: #{tpu_custom_call.1} parent=1 // pred_region
      _
    $region21: #{tpu_custom_call.1} parent=1 // pred_fallthru
      _
    // Predicated region
    $region22: #{tpu_custom_call.1} parent=1 // pred_check
      _
    $region23: #{tpu_custom_call.1} parent=1 // pred_check_branch
      %34 = sbr.rel (0) target = $region25
    $region24: #{tpu_custom_call.1} parent=1 // pred_region
      _
    $region25: #{tpu_custom_call.1} parent=1 // pred_fallthru
      _
    // Predicated region
    $region26: #{tpu_custom_call.1} parent=1 // pred_check
      _
    $region27: #{tpu_custom_call.1} parent=1 // pred_check_branch
      %36 = sbr.rel (0) target = $region29
    $region28: #{tpu_custom_call.1} parent=1 // pred_region
      _
    $region29: #{tpu_custom_call.1} parent=1 // pred_fallthru
      _
    // Predicated region
    $region30: #{tpu_custom_call.1} parent=1 // pred_check
      _
    $region31: #{tpu_custom_call.1} parent=1 // pred_check_branch
      %38 = sbr.rel (0) target = $region33
    $region32: #{tpu_custom_call.1} parent=1 // pred_region
      _
    $region33: #{tpu_custom_call.1} parent=1 // pred_fallthru
      _
    // Predicated region
    $region34: #{tpu_custom_call.1} parent=1 // pred_check
      _
    $region35: #{tpu_custom_call.1} parent=1 // pred_check_branch
      %40 = sbr.rel (0) target = $region37
    $region36: #{tpu_custom_call.1} parent=1 // pred_region
      %41 = dma.done [#allocation4], 16
    $region37: #{tpu_custom_call.1} parent=1 // pred_fallthru
      _
    %42 = sfence
    %v43 = vld [vmem:[%s1] sm:$0x3]
    %v44 = vld [vmem:[%s2] sm:$0xff]
    %v45 = vld [vmem:[%s2 + $0x8] sm:$0xff]
    %v46 = vld [vmem:[%s2 + $0x10] sm:$0xff]
    %v47 = vld [vmem:[%s2 + $0x18] sm:$0xff]
    %v48 = vld [vmem:[%s2 + $0x20] sm:$0xff]
    %v49 = vld [vmem:[%s2 + $0x28] sm:$0xff]
    %v50 = vld [vmem:[%s2 + $0x30] sm:$0xff]
    %v51 = vld [vmem:[%s2 + $0x38] sm:$0xff]
    %v52 = vld [vmem:[%s2 + $0x40] sm:$0xff]
    %v53 = vld [vmem:[%s2 + $0x48] sm:$0xff]
    %v54 = vld [vmem:[%s2 + $0x50] sm:$0xff]
    %v55 = vld [vmem:[%s2 + $0x58] sm:$0xff]
    %v56 = vld [vmem:[%s2 + $0x60] sm:$0xff]
    %v57 = vld [vmem:[%s2 + $0x68] sm:$0xff]
    %v58 = vld [vmem:[%s2 + $0x70] sm:$0xff]
    %v59 = vld [vmem:[%s2 + $0x78] sm:$0xff]
    %v60 = vld [vmem:[%s3] sm:$0x1]
    %v61 = vlaneseq
    %v62 = vshrl.u32 %v61, 7
    %v63 = vsub.s32 0, %v62
    %v64 = vrot.slane %v60, %v63
    %v65 = vmul.f32 %v43, %v64
    %v66 = vld [vmem:[%s4] sm:$0x1]
    %v67 = vlaneseq
    %v68 = vshrl.u32 %v67, 7
    %v69 = vsub.s32 0, %v68
    %v70 = vrot.slane %v66, %v69
    %v71 = vmul.f32 %v43, %v70
    %v72 = vld [vmem:[%s5] sm:$0x1]
    %v73 = vlaneseq
    %v74 = vshrl.u32 %v73, 7
    %v75 = vsub.s32 0, %v74
    %v76 = vrot.slane %v72, %v75
    %v77 = vmul.f32 %v43, %v76
    %v78 = vld [vmem:[%s6] sm:$0xff]
    %v79 = vld [vmem:[%s6 + $0x8] sm:$0xff]
    %v80 = vld [vmem:[%s6 + $0x10] sm:$0xff]
    %v81 = vld [vmem:[%s6 + $0x18] sm:$0xff]
    %v82 = vld [vmem:[%s6 + $0x20] sm:$0xff]
    %v83 = vld [vmem:[%s6 + $0x28] sm:$0xff]
    %v84 = vld [vmem:[%s6 + $0x30] sm:$0xff]
    %v85 = vld [vmem:[%s6 + $0x38] sm:$0xff]
    %v86 = vld [vmem:[%s6 + $0x40] sm:$0xff]
    %v87 = vld [vmem:[%s6 + $0x48] sm:$0xff]
    %v88 = vld [vmem:[%s6 + $0x50] sm:$0xff]
    %v89 = vld [vmem:[%s6 + $0x58] sm:$0xff]
    %v90 = vld [vmem:[%s6 + $0x60] sm:$0xff]
    %v91 = vld [vmem:[%s6 + $0x68] sm:$0xff]
    %v92 = vld [vmem:[%s6 + $0x70] sm:$0xff]
    %v93 = vld [vmem:[%s6 + $0x78] sm:$0xff]
    %95 = vset.pattern.permute.xlu0 0
    %96 = vperm.xlu0 %95, %v78
    %v97 = vpop.permute.xlu0 %96
    %100 = vset.pattern.permute.xlu0 0
    %101 = vperm.xlu0 %100, %v79
    %v102 = vpop.permute.xlu0 %101
    %105 = vset.pattern.permute.xlu0 0
    %106 = vperm.xlu0 %105, %v80
    %v107 = vpop.permute.xlu0 %106
    %110 = vset.pattern.permute.xlu0 0
    %111 = vperm.xlu0 %110, %v81
    %v112 = vpop.permute.xlu0 %111
    %115 = vset.pattern.permute.xlu0 0
    %116 = vperm.xlu0 %115, %v82
    %v117 = vpop.permute.xlu0 %116
    %120 = vset.pattern.permute.xlu0 0
    %121 = vperm.xlu0 %120, %v83
    %v122 = vpop.permute.xlu0 %121
    %125 = vset.pattern.permute.xlu0 0
    %126 = vperm.xlu0 %125, %v84
    %v127 = vpop.permute.xlu0 %126
    %130 = vset.pattern.permute.xlu0 0
    %131 = vperm.xlu0 %130, %v85
    %v132 = vpop.permute.xlu0 %131
    %135 = vset.pattern.permute.xlu0 0
    %136 = vperm.xlu0 %135, %v86
    %v137 = vpop.permute.xlu0 %136
    %140 = vset.pattern.permute.xlu0 0
    %141 = vperm.xlu0 %140, %v87
    %v142 = vpop.permute.xlu0 %141
    %145 = vset.pattern.permute.xlu0 0
    %146 = vperm.xlu0 %145, %v88
    %v147 = vpop.permute.xlu0 %146
    %150 = vset.pattern.permute.xlu0 0
    %151 = vperm.xlu0 %150, %v89
    %v152 = vpop.permute.xlu0 %151
    %155 = vset.pattern.permute.xlu0 0
    %156 = vperm.xlu0 %155, %v90
    %v157 = vpop.permute.xlu0 %156
    %160 = vset.pattern.permute.xlu0 0
    %161 = vperm.xlu0 %160, %v91
    %v162 = vpop.permute.xlu0 %161
    %165 = vset.pattern.permute.xlu0 0
    %166 = vperm.xlu0 %165, %v92
    %v167 = vpop.permute.xlu0 %166
    %170 = vset.pattern.permute.xlu0 0
    %171 = vperm.xlu0 %170, %v93
    %v172 = vpop.permute.xlu0 %171
    %v174 = vmul.f32 %v44, %v97
    %v175 = vmul.f32 %v45, %v102
    %v176 = vmul.f32 %v46, %v107
    %v177 = vmul.f32 %v47, %v112
    %v178 = vmul.f32 %v48, %v117
    %v179 = vmul.f32 %v49, %v122
    %v180 = vmul.f32 %v50, %v127
    %v181 = vmul.f32 %v51, %v132
    %v182 = vmul.f32 %v52, %v137
    %v183 = vmul.f32 %v53, %v142
    %v184 = vmul.f32 %v54, %v147
    %v185 = vmul.f32 %v55, %v152
    %v186 = vmul.f32 %v56, %v157
    %v187 = vmul.f32 %v57, %v162
    %v188 = vmul.f32 %v58, %v167
    %v189 = vmul.f32 %v59, %v172
    %v190 = vld [vmem:[%s7] sm:$0xff]
    %v191 = vld [vmem:[%s7 + $0x8] sm:$0xff]
    %v192 = vld [vmem:[%s7 + $0x10] sm:$0xff]
    %v193 = vld [vmem:[%s7 + $0x18] sm:$0xff]
    %v194 = vld [vmem:[%s7 + $0x20] sm:$0xff]
    %v195 = vld [vmem:[%s7 + $0x28] sm:$0xff]
    %v196 = vld [vmem:[%s7 + $0x30] sm:$0xff]
    %v197 = vld [vmem:[%s7 + $0x38] sm:$0xff]
    %v198 = vld [vmem:[%s7 + $0x40] sm:$0xff]
    %v199 = vld [vmem:[%s7 + $0x48] sm:$0xff]
    %v200 = vld [vmem:[%s7 + $0x50] sm:$0xff]
    %v201 = vld [vmem:[%s7 + $0x58] sm:$0xff]
    %v202 = vld [vmem:[%s7 + $0x60] sm:$0xff]
    %v203 = vld [vmem:[%s7 + $0x68] sm:$0xff]
    %v204 = vld [vmem:[%s7 + $0x70] sm:$0xff]
    %v205 = vld [vmem:[%s7 + $0x78] sm:$0xff]
    %207 = vset.pattern.permute.xlu0 0
    %208 = vperm.xlu0 %207, %v190
    %v209 = vpop.permute.xlu0 %208
    %212 = vset.pattern.permute.xlu0 0
    %213 = vperm.xlu0 %212, %v191
    %v214 = vpop.permute.xlu0 %213
    %217 = vset.pattern.permute.xlu0 0
    %218 = vperm.xlu0 %217, %v192
    %v219 = vpop.permute.xlu0 %218
    %222 = vset.pattern.permute.xlu0 0
    %223 = vperm.xlu0 %222, %v193
    %v224 = vpop.permute.xlu0 %223
    %227 = vset.pattern.permute.xlu0 0
    %228 = vperm.xlu0 %227, %v194
    %v229 = vpop.permute.xlu0 %228
    %232 = vset.pattern.permute.xlu0 0
    %233 = vperm.xlu0 %232, %v195
    %v234 = vpop.permute.xlu0 %233
    %237 = vset.pattern.permute.xlu0 0
    %238 = vperm.xlu0 %237, %v196
    %v239 = vpop.permute.xlu0 %238
    %242 = vset.pattern.permute.xlu0 0
    %243 = vperm.xlu0 %242, %v197
    %v244 = vpop.permute.xlu0 %243
    %247 = vset.pattern.permute.xlu0 0
    %248 = vperm.xlu0 %247, %v198
    %v249 = vpop.permute.xlu0 %248
    %252 = vset.pattern.permute.xlu0 0
    %253 = vperm.xlu0 %252, %v199
    %v254 = vpop.permute.xlu0 %253
    %257 = vset.pattern.permute.xlu0 0
    %258 = vperm.xlu0 %257, %v200
    %v259 = vpop.permute.xlu0 %258
    %262 = vset.pattern.permute.xlu0 0
    %263 = vperm.xlu0 %262, %v201
    %v264 = vpop.permute.xlu0 %263
    %267 = vset.pattern.permute.xlu0 0
    %268 = vperm.xlu0 %267, %v202
    %v269 = vpop.permute.xlu0 %268
    %272 = vset.pattern.permute.xlu0 0
    %273 = vperm.xlu0 %272, %v203
    %v274 = vpop.permute.xlu0 %273
    %277 = vset.pattern.permute.xlu0 0
    %278 = vperm.xlu0 %277, %v204
    %v279 = vpop.permute.xlu0 %278
    %282 = vset.pattern.permute.xlu0 0
    %283 = vperm.xlu0 %282, %v205
    %v284 = vpop.permute.xlu0 %283
    %v286 = vmul.f32 %v44, %v209
    %v287 = vmul.f32 %v45, %v214
    %v288 = vmul.f32 %v46, %v219
    %v289 = vmul.f32 %v47, %v224
    %v290 = vmul.f32 %v48, %v229
    %v291 = vmul.f32 %v49, %v234
    %v292 = vmul.f32 %v50, %v239
    %v293 = vmul.f32 %v51, %v244
    %v294 = vmul.f32 %v52, %v249
    %v295 = vmul.f32 %v53, %v254
    %v296 = vmul.f32 %v54, %v259
    %v297 = vmul.f32 %v55, %v264
    %v298 = vmul.f32 %v56, %v269
    %v299 = vmul.f32 %v57, %v274
    %v300 = vmul.f32 %v58, %v279
    %v301 = vmul.f32 %v59, %v284
    %vm302 = vcmask 1041408
    %v303 = vsel %vm302, %v71, -inf
    %304 = vmax.xlane.f32.xlu0 %v303
    %v305 = vpop.xlane.xlu0 %304
    %v306 = vsel %vm302, %v71, inf
    %307 = vmin.xlane.f32.xlu0 %v306
    %v308 = vpop.xlane.xlu0 %307
    %vm309 = vcmp.ge.f32.partialorder %v65, 0.0
    %v310 = vmul.f32 %v65, %v305
    %v311 = vmul.f32 %v65, %v308
    %v312 = vsel %vm309, %v310, %v311
    %v313 = vmul.f32 %v65, %v71
    %v314 = vsub.f32 %v313, %v312
    %v315 = vmul.f32 %v314, 1.442695
    %v316 = vpow.pop %v315
    %318 = vset.pattern.permute.xlu0 0
    %319 = vperm.xlu0 %318, %v174
    %v320 = vpop.permute.xlu0 %319
    %323 = vset.pattern.permute.xlu0 0
    %324 = vperm.xlu0 %323, %v175
    %v325 = vpop.permute.xlu0 %324
    %328 = vset.pattern.permute.xlu0 0
    %329 = vperm.xlu0 %328, %v176
    %v330 = vpop.permute.xlu0 %329
    %333 = vset.pattern.permute.xlu0 0
    %334 = vperm.xlu0 %333, %v177
    %v335 = vpop.permute.xlu0 %334
    %338 = vset.pattern.permute.xlu0 0
    %339 = vperm.xlu0 %338, %v178
    %v340 = vpop.permute.xlu0 %339
    %343 = vset.pattern.permute.xlu0 0
    %344 = vperm.xlu0 %343, %v179
    %v345 = vpop.permute.xlu0 %344
    %348 = vset.pattern.permute.xlu0 0
    %349 = vperm.xlu0 %348, %v180
    %v350 = vpop.permute.xlu0 %349
    %353 = vset.pattern.permute.xlu0 0
    %354 = vperm.xlu0 %353, %v181
    %v355 = vpop.permute.xlu0 %354
    %358 = vset.pattern.permute.xlu0 0
    %359 = vperm.xlu0 %358, %v182
    %v360 = vpop.permute.xlu0 %359
    %363 = vset.pattern.permute.xlu0 0
    %364 = vperm.xlu0 %363, %v183
    %v365 = vpop.permute.xlu0 %364
    %368 = vset.pattern.permute.xlu0 0
    %369 = vperm.xlu0 %368, %v184
    %v370 = vpop.permute.xlu0 %369
    %373 = vset.pattern.permute.xlu0 0
    %374 = vperm.xlu0 %373, %v185
    %v375 = vpop.permute.xlu0 %374
    %378 = vset.pattern.permute.xlu0 0
    %379 = vperm.xlu0 %378, %v186
    %v380 = vpop.permute.xlu0 %379
    %383 = vset.pattern.permute.xlu0 0
    %384 = vperm.xlu0 %383, %v187
    %v385 = vpop.permute.xlu0 %384
    %388 = vset.pattern.permute.xlu0 0
    %389 = vperm.xlu0 %388, %v188
    %v390 = vpop.permute.xlu0 %389
    %393 = vset.pattern.permute.xlu0 0
    %394 = vperm.xlu0 %393, %v189
    %v395 = vpop.permute.xlu0 %394
    %v397 = vlaneseq
    %v398 = vshrl.u32 %v397, 7
    %v399 = vsub.s32 0, %v398
    %v400 = vrot.slane %v65, %v399
    %v401 = vmul.f32 %v320, %v400
    %v402 = vmul.f32 %v325, %v400
    %v403 = vmul.f32 %v330, %v400
    %v404 = vmul.f32 %v335, %v400
    %v405 = vmul.f32 %v340, %v400
    %v406 = vmul.f32 %v345, %v400
    %v407 = vmul.f32 %v350, %v400
    %v408 = vmul.f32 %v355, %v400
    %v409 = vmul.f32 %v360, %v400
    %v410 = vmul.f32 %v365, %v400
    %v411 = vmul.f32 %v370, %v400
    %v412 = vmul.f32 %v375, %v400
    %v413 = vmul.f32 %v380, %v400
    %v414 = vmul.f32 %v385, %v400
    %v415 = vmul.f32 %v390, %v400
    %v416 = vmul.f32 %v395, %v400
    %v417 = vlaneseq
    %v418 = vshrl.u32 %v417, 7
    %v419 = vsub.s32 0, %v418
    %v420 = vrot.slane %v312, %v419
    %v421 = vsub.f32 %v401, %v420
    %v422 = vsub.f32 %v402, %v420
    %v423 = vsub.f32 %v403, %v420
    %v424 = vsub.f32 %v404, %v420
    %v425 = vsub.f32 %v405, %v420
    %v426 = vsub.f32 %v406, %v420
    %v427 = vsub.f32 %v407, %v420
    %v428 = vsub.f32 %v408, %v420
    %v429 = vsub.f32 %v409, %v420
    %v430 = vsub.f32 %v410, %v420
    %v431 = vsub.f32 %v411, %v420
    %v432 = vsub.f32 %v412, %v420
    %v433 = vsub.f32 %v413, %v420
    %v434 = vsub.f32 %v414, %v420
    %v435 = vsub.f32 %v415, %v420
    %v436 = vsub.f32 %v416, %v420
    %v437 = vmul.f32 %v421, 1.442695
    %v438 = vpow.pop %v437
    %v439 = vmul.f32 %v422, 1.442695
    %v440 = vpow.pop %v439
    %v441 = vmul.f32 %v423, 1.442695
    %v442 = vpow.pop %v441
    %v443 = vmul.f32 %v424, 1.442695
    %v444 = vpow.pop %v443
    %v445 = vmul.f32 %v425, 1.442695
    %v446 = vpow.pop %v445
    %v447 = vmul.f32 %v426, 1.442695
    %v448 = vpow.pop %v447
    %v449 = vmul.f32 %v427, 1.442695
    %v450 = vpow.pop %v449
    %v451 = vmul.f32 %v428, 1.442695
    %v452 = vpow.pop %v451
    %v453 = vmul.f32 %v429, 1.442695
    %v454 = vpow.pop %v453
    %v455 = vmul.f32 %v430, 1.442695
    %v456 = vpow.pop %v455
    %v457 = vmul.f32 %v431, 1.442695
    %v458 = vpow.pop %v457
    %v459 = vmul.f32 %v432, 1.442695
    %v460 = vpow.pop %v459
    %v461 = vmul.f32 %v433, 1.442695
    %v462 = vpow.pop %v461
    %v463 = vmul.f32 %v434, 1.442695
    %v464 = vpow.pop %v463
    %v465 = vmul.f32 %v435, 1.442695
    %v466 = vpow.pop %v465
    %v467 = vmul.f32 %v436, 1.442695
    %v468 = vpow.pop %v467
    %470 = vset.pattern.permute.xlu0 0
    %471 = vperm.xlu0 %470, %v286
    %v472 = vpop.permute.xlu0 %471
    %475 = vset.pattern.permute.xlu0 0
    %476 = vperm.xlu0 %475, %v287
    %v477 = vpop.permute.xlu0 %476
    %480 = vset.pattern.permute.xlu0 0
    %481 = vperm.xlu0 %480, %v288
    %v482 = vpop.permute.xlu0 %481
    %485 = vset.pattern.permute.xlu0 0
    %486 = vperm.xlu0 %485, %v289
    %v487 = vpop.permute.xlu0 %486
    %490 = vset.pattern.permute.xlu0 0
    %491 = vperm.xlu0 %490, %v290
    %v492 = vpop.permute.xlu0 %491
    %495 = vset.pattern.permute.xlu0 0
    %496 = vperm.xlu0 %495, %v291
    %v497 = vpop.permute.xlu0 %496
    %500 = vset.pattern.permute.xlu0 0
    %501 = vperm.xlu0 %500, %v292
    %v502 = vpop.permute.xlu0 %501
    %505 = vset.pattern.permute.xlu0 0
    %506 = vperm.xlu0 %505, %v293
    %v507 = vpop.permute.xlu0 %506
    %510 = vset.pattern.permute.xlu0 0
    %511 = vperm.xlu0 %510, %v294
    %v512 = vpop.permute.xlu0 %511
    %515 = vset.pattern.permute.xlu0 0
    %516 = vperm.xlu0 %515, %v295
    %v517 = vpop.permute.xlu0 %516
    %520 = vset.pattern.permute.xlu0 0
    %521 = vperm.xlu0 %520, %v296
    %v522 = vpop.permute.xlu0 %521
    %525 = vset.pattern.permute.xlu0 0
    %526 = vperm.xlu0 %525, %v297
    %v527 = vpop.permute.xlu0 %526
    %530 = vset.pattern.permute.xlu0 0
    %531 = vperm.xlu0 %530, %v298
    %v532 = vpop.permute.xlu0 %531
    %535 = vset.pattern.permute.xlu0 0
    %536 = vperm.xlu0 %535, %v299
    %v537 = vpop.permute.xlu0 %536
    %540 = vset.pattern.permute.xlu0 0
    %541 = vperm.xlu0 %540, %v300
    %v542 = vpop.permute.xlu0 %541
    %545 = vset.pattern.permute.xlu0 0
    %546 = vperm.xlu0 %545, %v301
    %v547 = vpop.permute.xlu0 %546
    %v549 = vmul.f32 %v438, %v472
    %v550 = vmul.f32 %v440, %v477
    %v551 = vmul.f32 %v442, %v482
    %v552 = vmul.f32 %v444, %v487
    %v553 = vmul.f32 %v446, %v492
    %v554 = vmul.f32 %v448, %v497
    %v555 = vmul.f32 %v450, %v502
    %v556 = vmul.f32 %v452, %v507
    %v557 = vmul.f32 %v454, %v512
    %v558 = vmul.f32 %v456, %v517
    %v559 = vmul.f32 %v458, %v522
    %v560 = vmul.f32 %v460, %v527
    %v561 = vmul.f32 %v462, %v532
    %v562 = vmul.f32 %v464, %v537
    %v563 = vmul.f32 %v466, %v542
    %v564 = vmul.f32 %v468, %v547
    %v565 = vadd.f32 %v549, %v550
    %v566 = vadd.f32 %v565, %v551
    %v567 = vadd.f32 %v566, %v552
    %v568 = vadd.f32 %v567, %v553
    %v569 = vadd.f32 %v568, %v554
    %v570 = vadd.f32 %v569, %v555
    %v571 = vadd.f32 %v570, %v556
    %v572 = vadd.f32 %v571, %v557
    %v573 = vadd.f32 %v572, %v558
    %v574 = vadd.f32 %v573, %v559
    %v575 = vadd.f32 %v574, %v560
    %v576 = vadd.f32 %v575, %v561
    %v577 = vadd.f32 %v576, %v562
    %v578 = vadd.f32 %v577, %v563
    %v579 = vadd.f32 %v578, %v564
    %v580 = vrot.slane %v579, 4
    %v581 = vadd.f32 %v579, %v580
    %v582 = vrot.slane %v581, 2
    %v583 = vadd.f32 %v581, %v582
    %v584 = vrot.slane %v583, 1
    %v585 = vadd.f32 %v583, %v584
    %v586 = vadd.f32 %v585, 0.0
    %v587 = vadd.f32 %v438, %v440
    %v588 = vadd.f32 %v587, %v442
    %v589 = vadd.f32 %v588, %v444
    %v590 = vadd.f32 %v589, %v446
    %v591 = vadd.f32 %v590, %v448
    %v592 = vadd.f32 %v591, %v450
    %v593 = vadd.f32 %v592, %v452
    %v594 = vadd.f32 %v593, %v454
    %v595 = vadd.f32 %v594, %v456
    %v596 = vadd.f32 %v595, %v458
    %v597 = vadd.f32 %v596, %v460
    %v598 = vadd.f32 %v597, %v462
    %v599 = vadd.f32 %v598, %v464
    %v600 = vadd.f32 %v599, %v466
    %v601 = vadd.f32 %v600, %v468
    %v602 = vrot.slane %v601, 4
    %v603 = vadd.f32 %v601, %v602
    %v604 = vrot.slane %v603, 2
    %v605 = vadd.f32 %v603, %v604
    %v606 = vrot.slane %v605, 1
    %v607 = vadd.f32 %v605, %v606
    %v608 = vadd.f32 %v607, 0.0
    %609 = vset.pattern.permute.xlu0 1
    %610 = vperm.xlu0 %609, %v174
    %v611 = vpop.permute.xlu0 %610
    %613 = vset.pattern.permute.xlu0 1
    %614 = vperm.xlu0 %613, %v175
    %v615 = vpop.permute.xlu0 %614
    %617 = vset.pattern.permute.xlu0 1
    %618 = vperm.xlu0 %617, %v176
    %v619 = vpop.permute.xlu0 %618
    %621 = vset.pattern.permute.xlu0 1
    %622 = vperm.xlu0 %621, %v177
    %v623 = vpop.permute.xlu0 %622
    %625 = vset.pattern.permute.xlu0 1
    %626 = vperm.xlu0 %625, %v178
    %v627 = vpop.permute.xlu0 %626
    %629 = vset.pattern.permute.xlu0 1
    %630 = vperm.xlu0 %629, %v179
    %v631 = vpop.permute.xlu0 %630
    %633 = vset.pattern.permute.xlu0 1
    %634 = vperm.xlu0 %633, %v180
    %v635 = vpop.permute.xlu0 %634
    %637 = vset.pattern.permute.xlu0 1
    %638 = vperm.xlu0 %637, %v181
    %v639 = vpop.permute.xlu0 %638
    %641 = vset.pattern.permute.xlu0 1
    %642 = vperm.xlu0 %641, %v182
    %v643 = vpop.permute.xlu0 %642
    %645 = vset.pattern.permute.xlu0 1
    %646 = vperm.xlu0 %645, %v183
    %v647 = vpop.permute.xlu0 %646
    %649 = vset.pattern.permute.xlu0 1
    %650 = vperm.xlu0 %649, %v184
    %v651 = vpop.permute.xlu0 %650
    %653 = vset.pattern.permute.xlu0 1
    %654 = vperm.xlu0 %653, %v185
    %v655 = vpop.permute.xlu0 %654
    %657 = vset.pattern.permute.xlu0 1
    %658 = vperm.xlu0 %657, %v186
    %v659 = vpop.permute.xlu0 %658
    %661 = vset.pattern.permute.xlu0 1
    %662 = vperm.xlu0 %661, %v187
    %v663 = vpop.permute.xlu0 %662
    %665 = vset.pattern.permute.xlu0 1
    %666 = vperm.xlu0 %665, %v188
    %v667 = vpop.permute.xlu0 %666
    %669 = vset.pattern.permute.xlu0 1
    %670 = vperm.xlu0 %669, %v189
    %v671 = vpop.permute.xlu0 %670
    %v673 = vlaneseq
    %v674 = vshrl.u32 %v673, 7
    %v675 = vsub.s32 1, %v674
    %v676 = vrot.slane %v65, %v675
    %v677 = vmul.f32 %v611, %v676
    %v678 = vmul.f32 %v615, %v676
    %v679 = vmul.f32 %v619, %v676
    %v680 = vmul.f32 %v623, %v676
    %v681 = vmul.f32 %v627, %v676
    %v682 = vmul.f32 %v631, %v676
    %v683 = vmul.f32 %v635, %v676
    %v684 = vmul.f32 %v639, %v676
    %v685 = vmul.f32 %v643, %v676
    %v686 = vmul.f32 %v647, %v676
    %v687 = vmul.f32 %v651, %v676
    %v688 = vmul.f32 %v655, %v676
    %v689 = vmul.f32 %v659, %v676
    %v690 = vmul.f32 %v663, %v676
    %v691 = vmul.f32 %v667, %v676
    %v692 = vmul.f32 %v671, %v676
    %v693 = vlaneseq
    %v694 = vshrl.u32 %v693, 7
    %v695 = vsub.s32 1, %v694
    %v696 = vrot.slane %v312, %v695
    %v697 = vsub.f32 %v677, %v696
    %v698 = vsub.f32 %v678, %v696
    %v699 = vsub.f32 %v679, %v696
    %v700 = vsub.f32 %v680, %v696
    %v701 = vsub.f32 %v681, %v696
    %v702 = vsub.f32 %v682, %v696
    %v703 = vsub.f32 %v683, %v696
    %v704 = vsub.f32 %v684, %v696
    %v705 = vsub.f32 %v685, %v696
    %v706 = vsub.f32 %v686, %v696
    %v707 = vsub.f32 %v687, %v696
    %v708 = vsub.f32 %v688, %v696
    %v709 = vsub.f32 %v689, %v696
    %v710 = vsub.f32 %v690, %v696
    %v711 = vsub.f32 %v691, %v696
    %v712 = vsub.f32 %v692, %v696
    %v713 = vmul.f32 %v697, 1.442695
    %v714 = vpow.pop %v713
    %v715 = vmul.f32 %v698, 1.442695
    %v716 = vpow.pop %v715
    %v717 = vmul.f32 %v699, 1.442695
    %v718 = vpow.pop %v717
    %v719 = vmul.f32 %v700, 1.442695
    %v720 = vpow.pop %v719
    %v721 = vmul.f32 %v701, 1.442695
    %v722 = vpow.pop %v721
    %v723 = vmul.f32 %v702, 1.442695
    %v724 = vpow.pop %v723
    %v725 = vmul.f32 %v703, 1.442695
    %v726 = vpow.pop %v725
    %v727 = vmul.f32 %v704, 1.442695
    %v728 = vpow.pop %v727
    %v729 = vmul.f32 %v705, 1.442695
    %v730 = vpow.pop %v729
    %v731 = vmul.f32 %v706, 1.442695
    %v732 = vpow.pop %v731
    %v733 = vmul.f32 %v707, 1.442695
    %v734 = vpow.pop %v733
    %v735 = vmul.f32 %v708, 1.442695
    %v736 = vpow.pop %v735
    %v737 = vmul.f32 %v709, 1.442695
    %v738 = vpow.pop %v737
    %v739 = vmul.f32 %v710, 1.442695
    %v740 = vpow.pop %v739
    %v741 = vmul.f32 %v711, 1.442695
    %v742 = vpow.pop %v741
    %v743 = vmul.f32 %v712, 1.442695
    %v744 = vpow.pop %v743
    %745 = vset.pattern.permute.xlu0 1
    %746 = vperm.xlu0 %745, %v286
    %v747 = vpop.permute.xlu0 %746
    %749 = vset.pattern.permute.xlu0 1
    %750 = vperm.xlu0 %749, %v287
    %v751 = vpop.permute.xlu0 %750
    %753 = vset.pattern.permute.xlu0 1
    %754 = vperm.xlu0 %753, %v288
    %v755 = vpop.permute.xlu0 %754
    %757 = vset.pattern.permute.xlu0 1
    %758 = vperm.xlu0 %757, %v289
    %v759 = vpop.permute.xlu0 %758
    %761 = vset.pattern.permute.xlu0 1
    %762 = vperm.xlu0 %761, %v290
    %v763 = vpop.permute.xlu0 %762
    %765 = vset.pattern.permute.xlu0 1
    %766 = vperm.xlu0 %765, %v291
    %v767 = vpop.permute.xlu0 %766
    %769 = vset.pattern.permute.xlu0 1
    %770 = vperm.xlu0 %769, %v292
    %v771 = vpop.permute.xlu0 %770
    %773 = vset.pattern.permute.xlu0 1
    %774 = vperm.xlu0 %773, %v293
    %v775 = vpop.permute.xlu0 %774
    %777 = vset.pattern.permute.xlu0 1
    %778 = vperm.xlu0 %777, %v294
    %v779 = vpop.permute.xlu0 %778
    %781 = vset.pattern.permute.xlu0 1
    %782 = vperm.xlu0 %781, %v295
    %v783 = vpop.permute.xlu0 %782
    %785 = vset.pattern.permute.xlu0 1
    %786 = vperm.xlu0 %785, %v296
    %v787 = vpop.permute.xlu0 %786
    %789 = vset.pattern.permute.xlu0 1
    %790 = vperm.xlu0 %789, %v297
    %v791 = vpop.permute.xlu0 %790
    %793 = vset.pattern.permute.xlu0 1
    %794 = vperm.xlu0 %793, %v298
    %v795 = vpop.permute.xlu0 %794
    %797 = vset.pattern.permute.xlu0 1
    %798 = vperm.xlu0 %797, %v299
    %v799 = vpop.permute.xlu0 %798
    %801 = vset.pattern.permute.xlu0 1
    %802 = vperm.xlu0 %801, %v300
    %v803 = vpop.permute.xlu0 %802
    %805 = vset.pattern.permute.xlu0 1
    %806 = vperm.xlu0 %805, %v301
    %v807 = vpop.permute.xlu0 %806
    %v809 = vmul.f32 %v714, %v747
    %v810 = vmul.f32 %v716, %v751
    %v811 = vmul.f32 %v718, %v755
    %v812 = vmul.f32 %v720, %v759
    %v813 = vmul.f32 %v722, %v763
    %v814 = vmul.f32 %v724, %v767
    %v815 = vmul.f32 %v726, %v771
    %v816 = vmul.f32 %v728, %v775
    %v817 = vmul.f32 %v730, %v779
    %v818 = vmul.f32 %v732, %v783
    %v819 = vmul.f32 %v734, %v787
    %v820 = vmul.f32 %v736, %v791
    %v821 = vmul.f32 %v738, %v795
    %v822 = vmul.f32 %v740, %v799
    %v823 = vmul.f32 %v742, %v803
    %v824 = vmul.f32 %v744, %v807
    %v825 = vadd.f32 %v809, %v810
    %v826 = vadd.f32 %v825, %v811
    %v827 = vadd.f32 %v826, %v812
    %v828 = vadd.f32 %v827, %v813
    %v829 = vadd.f32 %v828, %v814
    %v830 = vadd.f32 %v829, %v815
    %v831 = vadd.f32 %v830, %v816
    %v832 = vadd.f32 %v831, %v817
    %v833 = vadd.f32 %v832, %v818
    %v834 = vadd.f32 %v833, %v819
    %v835 = vadd.f32 %v834, %v820
    %v836 = vadd.f32 %v835, %v821
    %v837 = vadd.f32 %v836, %v822
    %v838 = vadd.f32 %v837, %v823
    %v839 = vadd.f32 %v838, %v824
    %v840 = vrot.slane %v839, 4
    %v841 = vadd.f32 %v839, %v840
    %v842 = vrot.slane %v841, 2
    %v843 = vadd.f32 %v841, %v842
    %v844 = vrot.slane %v843, 1
    %v845 = vadd.f32 %v843, %v844
    %v846 = vadd.f32 %v845, 0.0
    %v847 = vadd.f32 %v714, %v716
    %v848 = vadd.f32 %v847, %v718
    %v849 = vadd.f32 %v848, %v720
    %v850 = vadd.f32 %v849, %v722
    %v851 = vadd.f32 %v850, %v724
    %v852 = vadd.f32 %v851, %v726
    %v853 = vadd.f32 %v852, %v728
    %v854 = vadd.f32 %v853, %v730
    %v855 = vadd.f32 %v854, %v732
    %v856 = vadd.f32 %v855, %v734
    %v857 = vadd.f32 %v856, %v736
    %v858 = vadd.f32 %v857, %v738
    %v859 = vadd.f32 %v858, %v740
    %v860 = vadd.f32 %v859, %v742
    %v861 = vadd.f32 %v860, %v744
    %v862 = vrot.slane %v861, 4
    %v863 = vadd.f32 %v861, %v862
    %v864 = vrot.slane %v863, 2
    %v865 = vadd.f32 %v863, %v864
    %v866 = vrot.slane %v865, 1
    %v867 = vadd.f32 %v865, %v866
    %v868 = vadd.f32 %v867, 0.0
    %vm869 = vcmask 1040384
    %v870 = vsel %vm869, %v586, %v846
    %v871 = vsel %vm869, %v608, %v868
    %v872 = vmul.f32 %v316, %v77
    %v873 = vsub.f32 %v870, %v872
    %v874 = vrcp.pop %v871
    %v875 = vmul.f32 %v873, %v874
    %s876 = sld [smem:[#allocation2]]
    %v877 = vstv %s876
    %v878 = vmul.f32 %v875, %v877
    %v879 = vadd.f32 %v878, 0.0
    %v880 = vld [vmem:[%s3 + $0x1] sm:$0x1]
    %v881 = vlaneseq
    %v882 = vshrl.u32 %v881, 7
    %v883 = vsub.s32 0, %v882
    %v884 = vrot.slane %v880, %v883
    %v885 = vmul.f32 %v43, %v884
    %v886 = vld [vmem:[%s4 + $0x1] sm:$0x1]
    %v887 = vlaneseq
    %v888 = vshrl.u32 %v887, 7
    %v889 = vsub.s32 0, %v888
    %v890 = vrot.slane %v886, %v889
    %v891 = vmul.f32 %v43, %v890
    %v892 = vld [vmem:[%s5 + $0x1] sm:$0x1]
    %v893 = vlaneseq
    %v894 = vshrl.u32 %v893, 7
    %v895 = vsub.s32 0, %v894
    %v896 = vrot.slane %v892, %v895
    %v897 = vmul.f32 %v43, %v896
    %898 = vset.pattern.permute.xlu0 1
    %899 = vperm.xlu0 %898, %v78
    %v900 = vpop.permute.xlu0 %899
    %902 = vset.pattern.permute.xlu0 1
    %903 = vperm.xlu0 %902, %v79
    %v904 = vpop.permute.xlu0 %903
    %906 = vset.pattern.permute.xlu0 1
    %907 = vperm.xlu0 %906, %v80
    %v908 = vpop.permute.xlu0 %907
    %910 = vset.pattern.permute.xlu0 1
    %911 = vperm.xlu0 %910, %v81
    %v912 = vpop.permute.xlu0 %911
    %914 = vset.pattern.permute.xlu0 1
    %915 = vperm.xlu0 %914, %v82
    %v916 = vpop.permute.xlu0 %915
    %918 = vset.pattern.permute.xlu0 1
    %919 = vperm.xlu0 %918, %v83
    %v920 = vpop.permute.xlu0 %919
    %922 = vset.pattern.permute.xlu0 1
    %923 = vperm.xlu0 %922, %v84
    %v924 = vpop.permute.xlu0 %923
    %926 = vset.pattern.permute.xlu0 1
    %927 = vperm.xlu0 %926, %v85
    %v928 = vpop.permute.xlu0 %927
    %930 = vset.pattern.permute.xlu0 1
    %931 = vperm.xlu0 %930, %v86
    %v932 = vpop.permute.xlu0 %931
    %934 = vset.pattern.permute.xlu0 1
    %935 = vperm.xlu0 %934, %v87
    %v936 = vpop.permute.xlu0 %935
    %938 = vset.pattern.permute.xlu0 1
    %939 = vperm.xlu0 %938, %v88
    %v940 = vpop.permute.xlu0 %939
    %942 = vset.pattern.permute.xlu0 1
    %943 = vperm.xlu0 %942, %v89
    %v944 = vpop.permute.xlu0 %943
    %946 = vset.pattern.permute.xlu0 1
    %947 = vperm.xlu0 %946, %v90
    %v948 = vpop.permute.xlu0 %947
    %950 = vset.pattern.permute.xlu0 1
    %951 = vperm.xlu0 %950, %v91
    %v952 = vpop.permute.xlu0 %951
    %954 = vset.pattern.permute.xlu0 1
    %955 = vperm.xlu0 %954, %v92
    %v956 = vpop.permute.xlu0 %955
    %958 = vset.pattern.permute.xlu0 1
    %959 = vperm.xlu0 %958, %v93
    %v960 = vpop.permute.xlu0 %959
    %v962 = vmul.f32 %v44, %v900
    %v963 = vmul.f32 %v45, %v904
    %v964 = vmul.f32 %v46, %v908
    %v965 = vmul.f32 %v47, %v912
    %v966 = vmul.f32 %v48, %v916
    %v967 = vmul.f32 %v49, %v920
    %v968 = vmul.f32 %v50, %v924
    %v969 = vmul.f32 %v51, %v928
    %v970 = vmul.f32 %v52, %v932
    %v971 = vmul.f32 %v53, %v936
    %v972 = vmul.f32 %v54, %v940
    %v973 = vmul.f32 %v55, %v944
    %v974 = vmul.f32 %v56, %v948
    %v975 = vmul.f32 %v57, %v952
    %v976 = vmul.f32 %v58, %v956
    %v977 = vmul.f32 %v59, %v960
    %978 = vset.pattern.permute.xlu0 1
    %979 = vperm.xlu0 %978, %v190
    %v980 = vpop.permute.xlu0 %979
    %982 = vset.pattern.permute.xlu0 1
    %983 = vperm.xlu0 %982, %v191
    %v984 = vpop.permute.xlu0 %983
    %986 = vset.pattern.permute.xlu0 1
    %987 = vperm.xlu0 %986, %v192
    %v988 = vpop.permute.xlu0 %987
    %990 = vset.pattern.permute.xlu0 1
    %991 = vperm.xlu0 %990, %v193
    %v992 = vpop.permute.xlu0 %991
    %994 = vset.pattern.permute.xlu0 1
    %995 = vperm.xlu0 %994, %v194
    %v996 = vpop.permute.xlu0 %995
    %998 = vset.pattern.permute.xlu0 1
    %999 = vperm.xlu0 %998, %v195
    %v1000 = vpop.permute.xlu0 %999
    %1002 = vset.pattern.permute.xlu0 1
    %1003 = vperm.xlu0 %1002, %v196
    %v1004 = vpop.permute.xlu0 %1003
    %1006 = vset.pattern.permute.xlu0 1
    %1007 = vperm.xlu0 %1006, %v197
    %v1008 = vpop.permute.xlu0 %1007
    %1010 = vset.pattern.permute.xlu0 1
    %1011 = vperm.xlu0 %1010, %v198
    %v1012 = vpop.permute.xlu0 %1011
    %1014 = vset.pattern.permute.xlu0 1
    %1015 = vperm.xlu0 %1014, %v199
    %v1016 = vpop.permute.xlu0 %1015
    %1018 = vset.pattern.permute.xlu0 1
    %1019 = vperm.xlu0 %1018, %v200
    %v1020 = vpop.permute.xlu0 %1019
    %1022 = vset.pattern.permute.xlu0 1
    %1023 = vperm.xlu0 %1022, %v201
    %v1024 = vpop.permute.xlu0 %1023
    %1026 = vset.pattern.permute.xlu0 1
    %1027 = vperm.xlu0 %1026, %v202
    %v1028 = vpop.permute.xlu0 %1027
    %1030 = vset.pattern.permute.xlu0 1
    %1031 = vperm.xlu0 %1030, %v203
    %v1032 = vpop.permute.xlu0 %1031
    %1034 = vset.pattern.permute.xlu0 1
    %1035 = vperm.xlu0 %1034, %v204
    %v1036 = vpop.permute.xlu0 %1035
    %1038 = vset.pattern.permute.xlu0 1
    %1039 = vperm.xlu0 %1038, %v205
    %v1040 = vpop.permute.xlu0 %1039
    %v1042 = vmul.f32 %v44, %v980
    %v1043 = vmul.f32 %v45, %v984
    %v1044 = vmul.f32 %v46, %v988
    %v1045 = vmul.f32 %v47, %v992
    %v1046 = vmul.f32 %v48, %v996
    %v1047 = vmul.f32 %v49, %v1000
    %v1048 = vmul.f32 %v50, %v1004
    %v1049 = vmul.f32 %v51, %v1008
    %v1050 = vmul.f32 %v52, %v1012
    %v1051 = vmul.f32 %v53, %v1016
    %v1052 = vmul.f32 %v54, %v1020
    %v1053 = vmul.f32 %v55, %v1024
    %v1054 = vmul.f32 %v56, %v1028
    %v1055 = vmul.f32 %v57, %v1032
    %v1056 = vmul.f32 %v58, %v1036
    %v1057 = vmul.f32 %v59, %v1040
    %v1058 = vsel %vm302, %v891, -inf
    %1059 = vmax.xlane.f32.xlu0 %v1058
    %v1060 = vpop.xlane.xlu0 %1059
    %v1061 = vsel %vm302, %v891, inf
    %1062 = vmin.xlane.f32.xlu0 %v1061
    %v1063 = vpop.xlane.xlu0 %1062
    %vm1064 = vcmp.ge.f32.partialorder %v885, 0.0
    %v1065 = vmul.f32 %v885, %v1060
    %v1066 = vmul.f32 %v885, %v1063
    %v1067 = vsel %vm1064, %v1065, %v1066
    %v1068 = vmul.f32 %v885, %v891
    %v1069 = vsub.f32 %v1068, %v1067
    %v1070 = vmul.f32 %v1069, 1.442695
    %v1071 = vpow.pop %v1070
    %1073 = vset.pattern.permute.xlu0 0
    %1074 = vperm.xlu0 %1073, %v962
    %v1075 = vpop.permute.xlu0 %1074
    %1078 = vset.pattern.permute.xlu0 0
    %1079 = vperm.xlu0 %1078, %v963
    %v1080 = vpop.permute.xlu0 %1079
    %1083 = vset.pattern.permute.xlu0 0
    %1084 = vperm.xlu0 %1083, %v964
    %v1085 = vpop.permute.xlu0 %1084
    %1088 = vset.pattern.permute.xlu0 0
    %1089 = vperm.xlu0 %1088, %v965
    %v1090 = vpop.permute.xlu0 %1089
    %1093 = vset.pattern.permute.xlu0 0
    %1094 = vperm.xlu0 %1093, %v966
    %v1095 = vpop.permute.xlu0 %1094
    %1098 = vset.pattern.permute.xlu0 0
    %1099 = vperm.xlu0 %1098, %v967
    %v1100 = vpop.permute.xlu0 %1099
    %1103 = vset.pattern.permute.xlu0 0
    %1104 = vperm.xlu0 %1103, %v968
    %v1105 = vpop.permute.xlu0 %1104
    %1108 = vset.pattern.permute.xlu0 0
    %1109 = vperm.xlu0 %1108, %v969
    %v1110 = vpop.permute.xlu0 %1109
    %1113 = vset.pattern.permute.xlu0 0
    %1114 = vperm.xlu0 %1113, %v970
    %v1115 = vpop.permute.xlu0 %1114
    %1118 = vset.pattern.permute.xlu0 0
    %1119 = vperm.xlu0 %1118, %v971
    %v1120 = vpop.permute.xlu0 %1119
    %1123 = vset.pattern.permute.xlu0 0
    %1124 = vperm.xlu0 %1123, %v972
    %v1125 = vpop.permute.xlu0 %1124
    %1128 = vset.pattern.permute.xlu0 0
    %1129 = vperm.xlu0 %1128, %v973
    %v1130 = vpop.permute.xlu0 %1129
    %1133 = vset.pattern.permute.xlu0 0
    %1134 = vperm.xlu0 %1133, %v974
    %v1135 = vpop.permute.xlu0 %1134
    %1138 = vset.pattern.permute.xlu0 0
    %1139 = vperm.xlu0 %1138, %v975
    %v1140 = vpop.permute.xlu0 %1139
    %1143 = vset.pattern.permute.xlu0 0
    %1144 = vperm.xlu0 %1143, %v976
    %v1145 = vpop.permute.xlu0 %1144
    %1148 = vset.pattern.permute.xlu0 0
    %1149 = vperm.xlu0 %1148, %v977
    %v1150 = vpop.permute.xlu0 %1149
    %v1152 = vlaneseq
    %v1153 = vshrl.u32 %v1152, 7
    %v1154 = vsub.s32 0, %v1153
    %v1155 = vrot.slane %v885, %v1154
    %v1156 = vmul.f32 %v1075, %v1155
    %v1157 = vmul.f32 %v1080, %v1155
    %v1158 = vmul.f32 %v1085, %v1155
    %v1159 = vmul.f32 %v1090, %v1155
    %v1160 = vmul.f32 %v1095, %v1155
    %v1161 = vmul.f32 %v1100, %v1155
    %v1162 = vmul.f32 %v1105, %v1155
    %v1163 = vmul.f32 %v1110, %v1155
    %v1164 = vmul.f32 %v1115, %v1155
    %v1165 = vmul.f32 %v1120, %v1155
    %v1166 = vmul.f32 %v1125, %v1155
    %v1167 = vmul.f32 %v1130, %v1155
    %v1168 = vmul.f32 %v1135, %v1155
    %v1169 = vmul.f32 %v1140, %v1155
    %v1170 = vmul.f32 %v1145, %v1155
    %v1171 = vmul.f32 %v1150, %v1155
    %v1172 = vlaneseq
    %v1173 = vshrl.u32 %v1172, 7
    %v1174 = vsub.s32 0, %v1173
    %v1175 = vrot.slane %v1067, %v1174
    %v1176 = vsub.f32 %v1156, %v1175
    %v1177 = vsub.f32 %v1157, %v1175
    %v1178 = vsub.f32 %v1158, %v1175
    %v1179 = vsub.f32 %v1159, %v1175
    %v1180 = vsub.f32 %v1160, %v1175
    %v1181 = vsub.f32 %v1161, %v1175
    %v1182 = vsub.f32 %v1162, %v1175
    %v1183 = vsub.f32 %v1163, %v1175
    %v1184 = vsub.f32 %v1164, %v1175
    %v1185 = vsub.f32 %v1165, %v1175
    %v1186 = vsub.f32 %v1166, %v1175
    %v1187 = vsub.f32 %v1167, %v1175
    %v1188 = vsub.f32 %v1168, %v1175
    %v1189 = vsub.f32 %v1169, %v1175
    %v1190 = vsub.f32 %v1170, %v1175
    %v1191 = vsub.f32 %v1171, %v1175
    %v1192 = vmul.f32 %v1176, 1.442695
    %v1193 = vpow.pop %v1192
    %v1194 = vmul.f32 %v1177, 1.442695
    %v1195 = vpow.pop %v1194
    %v1196 = vmul.f32 %v1178, 1.442695
    %v1197 = vpow.pop %v1196
    %v1198 = vmul.f32 %v1179, 1.442695
    %v1199 = vpow.pop %v1198
    %v1200 = vmul.f32 %v1180, 1.442695
    %v1201 = vpow.pop %v1200
    %v1202 = vmul.f32 %v1181, 1.442695
    %v1203 = vpow.pop %v1202
    %v1204 = vmul.f32 %v1182, 1.442695
    %v1205 = vpow.pop %v1204
    %v1206 = vmul.f32 %v1183, 1.442695
    %v1207 = vpow.pop %v1206
    %v1208 = vmul.f32 %v1184, 1.442695
    %v1209 = vpow.pop %v1208
    %v1210 = vmul.f32 %v1185, 1.442695
    %v1211 = vpow.pop %v1210
    %v1212 = vmul.f32 %v1186, 1.442695
    %v1213 = vpow.pop %v1212
    %v1214 = vmul.f32 %v1187, 1.442695
    %v1215 = vpow.pop %v1214
    %v1216 = vmul.f32 %v1188, 1.442695
    %v1217 = vpow.pop %v1216
    %v1218 = vmul.f32 %v1189, 1.442695
    %v1219 = vpow.pop %v1218
    %v1220 = vmul.f32 %v1190, 1.442695
    %v1221 = vpow.pop %v1220
    %v1222 = vmul.f32 %v1191, 1.442695
    %v1223 = vpow.pop %v1222
    %1225 = vset.pattern.permute.xlu0 0
    %1226 = vperm.xlu0 %1225, %v1042
    %v1227 = vpop.permute.xlu0 %1226
    %1230 = vset.pattern.permute.xlu0 0
    %1231 = vperm.xlu0 %1230, %v1043
    %v1232 = vpop.permute.xlu0 %1231
    %1235 = vset.pattern.permute.xlu0 0
    %1236 = vperm.xlu0 %1235, %v1044
    %v1237 = vpop.permute.xlu0 %1236
    %1240 = vset.pattern.permute.xlu0 0
    %1241 = vperm.xlu0 %1240, %v1045
    %v1242 = vpop.permute.xlu0 %1241
    %1245 = vset.pattern.permute.xlu0 0
    %1246 = vperm.xlu0 %1245, %v1046
    %v1247 = vpop.permute.xlu0 %1246
    %1250 = vset.pattern.permute.xlu0 0
    %1251 = vperm.xlu0 %1250, %v1047
    %v1252 = vpop.permute.xlu0 %1251
    %1255 = vset.pattern.permute.xlu0 0
    %1256 = vperm.xlu0 %1255, %v1048
    %v1257 = vpop.permute.xlu0 %1256
    %1260 = vset.pattern.permute.xlu0 0
    %1261 = vperm.xlu0 %1260, %v1049
    %v1262 = vpop.permute.xlu0 %1261
    %1265 = vset.pattern.permute.xlu0 0
    %1266 = vperm.xlu0 %1265, %v1050
    %v1267 = vpop.permute.xlu0 %1266
    %1270 = vset.pattern.permute.xlu0 0
    %1271 = vperm.xlu0 %1270, %v1051
    %v1272 = vpop.permute.xlu0 %1271
    %1275 = vset.pattern.permute.xlu0 0
    %1276 = vperm.xlu0 %1275, %v1052
    %v1277 = vpop.permute.xlu0 %1276
    %1280 = vset.pattern.permute.xlu0 0
    %1281 = vperm.xlu0 %1280, %v1053
    %v1282 = vpop.permute.xlu0 %1281
    %1285 = vset.pattern.permute.xlu0 0
    %1286 = vperm.xlu0 %1285, %v1054
    %v1287 = vpop.permute.xlu0 %1286
    %1290 = vset.pattern.permute.xlu0 0
    %1291 = vperm.xlu0 %1290, %v1055
    %v1292 = vpop.permute.xlu0 %1291
    %1295 = vset.pattern.permute.xlu0 0
    %1296 = vperm.xlu0 %1295, %v1056
    %v1297 = vpop.permute.xlu0 %1296
    %1300 = vset.pattern.permute.xlu0 0
    %1301 = vperm.xlu0 %1300, %v1057
    %v1302 = vpop.permute.xlu0 %1301
    %v1304 = vmul.f32 %v1193, %v1227
    %v1305 = vmul.f32 %v1195, %v1232
    %v1306 = vmul.f32 %v1197, %v1237
    %v1307 = vmul.f32 %v1199, %v1242
    %v1308 = vmul.f32 %v1201, %v1247
    %v1309 = vmul.f32 %v1203, %v1252
    %v1310 = vmul.f32 %v1205, %v1257
    %v1311 = vmul.f32 %v1207, %v1262
    %v1312 = vmul.f32 %v1209, %v1267
    %v1313 = vmul.f32 %v1211, %v1272
    %v1314 = vmul.f32 %v1213, %v1277
    %v1315 = vmul.f32 %v1215, %v1282
    %v1316 = vmul.f32 %v1217, %v1287
    %v1317 = vmul.f32 %v1219, %v1292
    %v1318 = vmul.f32 %v1221, %v1297
    %v1319 = vmul.f32 %v1223, %v1302
    %v1320 = vadd.f32 %v1304, %v1305
    %v1321 = vadd.f32 %v1320, %v1306
    %v1322 = vadd.f32 %v1321, %v1307
    %v1323 = vadd.f32 %v1322, %v1308
    %v1324 = vadd.f32 %v1323, %v1309
    %v1325 = vadd.f32 %v1324, %v1310
    %v1326 = vadd.f32 %v1325, %v1311
    %v1327 = vadd.f32 %v1326, %v1312
    %v1328 = vadd.f32 %v1327, %v1313
    %v1329 = vadd.f32 %v1328, %v1314
    %v1330 = vadd.f32 %v1329, %v1315
    %v1331 = vadd.f32 %v1330, %v1316
    %v1332 = vadd.f32 %v1331, %v1317
    %v1333 = vadd.f32 %v1332, %v1318
    %v1334 = vadd.f32 %v1333, %v1319
    %v1335 = vrot.slane %v1334, 4
    %v1336 = vadd.f32 %v1334, %v1335
    %v1337 = vrot.slane %v1336, 2
    %v1338 = vadd.f32 %v1336, %v1337
    %v1339 = vrot.slane %v1338, 1
    %v1340 = vadd.f32 %v1338, %v1339
    %v1341 = vadd.f32 %v1340, 0.0
    %v1342 = vadd.f32 %v1193, %v1195
    %v1343 = vadd.f32 %v1342, %v1197
    %v1344 = vadd.f32 %v1343, %v1199
    %v1345 = vadd.f32 %v1344, %v1201
    %v1346 = vadd.f32 %v1345, %v1203
    %v1347 = vadd.f32 %v1346, %v1205
    %v1348 = vadd.f32 %v1347, %v1207
    %v1349 = vadd.f32 %v1348, %v1209
    %v1350 = vadd.f32 %v1349, %v1211
    %v1351 = vadd.f32 %v1350, %v1213
    %v1352 = vadd.f32 %v1351, %v1215
    %v1353 = vadd.f32 %v1352, %v1217
    %v1354 = vadd.f32 %v1353, %v1219
    %v1355 = vadd.f32 %v1354, %v1221
    %v1356 = vadd.f32 %v1355, %v1223
    %v1357 = vrot.slane %v1356, 4
    %v1358 = vadd.f32 %v1356, %v1357
    %v1359 = vrot.slane %v1358, 2
    %v1360 = vadd.f32 %v1358, %v1359
    %v1361 = vrot.slane %v1360, 1
    %v1362 = vadd.f32 %v1360, %v1361
    %v1363 = vadd.f32 %v1362, 0.0
    %1364 = vset.pattern.permute.xlu0 1
    %1365 = vperm.xlu0 %1364, %v962
    %v1366 = vpop.permute.xlu0 %1365
    %1368 = vset.pattern.permute.xlu0 1
    %1369 = vperm.xlu0 %1368, %v963
    %v1370 = vpop.permute.xlu0 %1369
    %1372 = vset.pattern.permute.xlu0 1
    %1373 = vperm.xlu0 %1372, %v964
    %v1374 = vpop.permute.xlu0 %1373
    %1376 = vset.pattern.permute.xlu0 1
    %1377 = vperm.xlu0 %1376, %v965
    %v1378 = vpop.permute.xlu0 %1377
    %1380 = vset.pattern.permute.xlu0 1
    %1381 = vperm.xlu0 %1380, %v966
    %v1382 = vpop.permute.xlu0 %1381
    %1384 = vset.pattern.permute.xlu0 1
    %1385 = vperm.xlu0 %1384, %v967
    %v1386 = vpop.permute.xlu0 %1385
    %1388 = vset.pattern.permute.xlu0 1
    %1389 = vperm.xlu0 %1388, %v968
    %v1390 = vpop.permute.xlu0 %1389
    %1392 = vset.pattern.permute.xlu0 1
    %1393 = vperm.xlu0 %1392, %v969
    %v1394 = vpop.permute.xlu0 %1393
    %1396 = vset.pattern.permute.xlu0 1
    %1397 = vperm.xlu0 %1396, %v970
    %v1398 = vpop.permute.xlu0 %1397
    %1400 = vset.pattern.permute.xlu0 1
    %1401 = vperm.xlu0 %1400, %v971
    %v1402 = vpop.permute.xlu0 %1401
    %1404 = vset.pattern.permute.xlu0 1
    %1405 = vperm.xlu0 %1404, %v972
    %v1406 = vpop.permute.xlu0 %1405
    %1408 = vset.pattern.permute.xlu0 1
    %1409 = vperm.xlu0 %1408, %v973
    %v1410 = vpop.permute.xlu0 %1409
    %1412 = vset.pattern.permute.xlu0 1
    %1413 = vperm.xlu0 %1412, %v974
    %v1414 = vpop.permute.xlu0 %1413
    %1416 = vset.pattern.permute.xlu0 1
    %1417 = vperm.xlu0 %1416, %v975
    %v1418 = vpop.permute.xlu0 %1417
    %1420 = vset.pattern.permute.xlu0 1
    %1421 = vperm.xlu0 %1420, %v976
    %v1422 = vpop.permute.xlu0 %1421
    %1424 = vset.pattern.permute.xlu0 1
    %1425 = vperm.xlu0 %1424, %v977
    %v1426 = vpop.permute.xlu0 %1425
    %v1428 = vlaneseq
    %v1429 = vshrl.u32 %v1428, 7
    %v1430 = vsub.s32 1, %v1429
    %v1431 = vrot.slane %v885, %v1430
    %v1432 = vmul.f32 %v1366, %v1431
    %v1433 = vmul.f32 %v1370, %v1431
    %v1434 = vmul.f32 %v1374, %v1431
    %v1435 = vmul.f32 %v1378, %v1431
    %v1436 = vmul.f32 %v1382, %v1431
    %v1437 = vmul.f32 %v1386, %v1431
    %v1438 = vmul.f32 %v1390, %v1431
    %v1439 = vmul.f32 %v1394, %v1431
    %v1440 = vmul.f32 %v1398, %v1431
    %v1441 = vmul.f32 %v1402, %v1431
    %v1442 = vmul.f32 %v1406, %v1431
    %v1443 = vmul.f32 %v1410, %v1431
    %v1444 = vmul.f32 %v1414, %v1431
    %v1445 = vmul.f32 %v1418, %v1431
    %v1446 = vmul.f32 %v1422, %v1431
    %v1447 = vmul.f32 %v1426, %v1431
    %v1448 = vlaneseq
    %v1449 = vshrl.u32 %v1448, 7
    %v1450 = vsub.s32 1, %v1449
    %v1451 = vrot.slane %v1067, %v1450
    %v1452 = vsub.f32 %v1432, %v1451
    %v1453 = vsub.f32 %v1433, %v1451
    %v1454 = vsub.f32 %v1434, %v1451
    %v1455 = vsub.f32 %v1435, %v1451
    %v1456 = vsub.f32 %v1436, %v1451
    %v1457 = vsub.f32 %v1437, %v1451
    %v1458 = vsub.f32 %v1438, %v1451
    %v1459 = vsub.f32 %v1439, %v1451
    %v1460 = vsub.f32 %v1440, %v1451
    %v1461 = vsub.f32 %v1441, %v1451
    %v1462 = vsub.f32 %v1442, %v1451
    %v1463 = vsub.f32 %v1443, %v1451
    %v1464 = vsub.f32 %v1444, %v1451
    %v1465 = vsub.f32 %v1445, %v1451
    %v1466 = vsub.f32 %v1446, %v1451
    %v1467 = vsub.f32 %v1447, %v1451
    %v1468 = vmul.f32 %v1452, 1.442695
    %v1469 = vpow.pop %v1468
    %v1470 = vmul.f32 %v1453, 1.442695
    %v1471 = vpow.pop %v1470
    %v1472 = vmul.f32 %v1454, 1.442695
    %v1473 = vpow.pop %v1472
    %v1474 = vmul.f32 %v1455, 1.442695
    %v1475 = vpow.pop %v1474
    %v1476 = vmul.f32 %v1456, 1.442695
    %v1477 = vpow.pop %v1476
    %v1478 = vmul.f32 %v1457, 1.442695
    %v1479 = vpow.pop %v1478
    %v1480 = vmul.f32 %v1458, 1.442695
    %v1481 = vpow.pop %v1480
    %v1482 = vmul.f32 %v1459, 1.442695
    %v1483 = vpow.pop %v1482
    %v1484 = vmul.f32 %v1460, 1.442695
    %v1485 = vpow.pop %v1484
    %v1486 = vmul.f32 %v1461, 1.442695
    %v1487 = vpow.pop %v1486
    %v1488 = vmul.f32 %v1462, 1.442695
    %v1489 = vpow.pop %v1488
    %v1490 = vmul.f32 %v1463, 1.442695
    %v1491 = vpow.pop %v1490
    %v1492 = vmul.f32 %v1464, 1.442695
    %v1493 = vpow.pop %v1492
    %v1494 = vmul.f32 %v1465, 1.442695
    %v1495 = vpow.pop %v1494
    %v1496 = vmul.f32 %v1466, 1.442695
    %v1497 = vpow.pop %v1496
    %v1498 = vmul.f32 %v1467, 1.442695
    %v1499 = vpow.pop %v1498
    %1500 = vset.pattern.permute.xlu0 1
    %1501 = vperm.xlu0 %1500, %v1042
    %v1502 = vpop.permute.xlu0 %1501
    %1504 = vset.pattern.permute.xlu0 1
    %1505 = vperm.xlu0 %1504, %v1043
    %v1506 = vpop.permute.xlu0 %1505
    %1508 = vset.pattern.permute.xlu0 1
    %1509 = vperm.xlu0 %1508, %v1044
    %v1510 = vpop.permute.xlu0 %1509
    %1512 = vset.pattern.permute.xlu0 1
    %1513 = vperm.xlu0 %1512, %v1045
    %v1514 = vpop.permute.xlu0 %1513
    %1516 = vset.pattern.permute.xlu0 1
    %1517 = vperm.xlu0 %1516, %v1046
    %v1518 = vpop.permute.xlu0 %1517
    %1520 = vset.pattern.permute.xlu0 1
    %1521 = vperm.xlu0 %1520, %v1047
    %v1522 = vpop.permute.xlu0 %1521
    %1524 = vset.pattern.permute.xlu0 1
    %1525 = vperm.xlu0 %1524, %v1048
    %v1526 = vpop.permute.xlu0 %1525
    %1528 = vset.pattern.permute.xlu0 1
    %1529 = vperm.xlu0 %1528, %v1049
    %v1530 = vpop.permute.xlu0 %1529
    %1532 = vset.pattern.permute.xlu0 1
    %1533 = vperm.xlu0 %1532, %v1050
    %v1534 = vpop.permute.xlu0 %1533
    %1536 = vset.pattern.permute.xlu0 1
    %1537 = vperm.xlu0 %1536, %v1051
    %v1538 = vpop.permute.xlu0 %1537
    %1540 = vset.pattern.permute.xlu0 1
    %1541 = vperm.xlu0 %1540, %v1052
    %v1542 = vpop.permute.xlu0 %1541
    %1544 = vset.pattern.permute.xlu0 1
    %1545 = vperm.xlu0 %1544, %v1053
    %v1546 = vpop.permute.xlu0 %1545
    %1548 = vset.pattern.permute.xlu0 1
    %1549 = vperm.xlu0 %1548, %v1054
    %v1550 = vpop.permute.xlu0 %1549
    %1552 = vset.pattern.permute.xlu0 1
    %1553 = vperm.xlu0 %1552, %v1055
    %v1554 = vpop.permute.xlu0 %1553
    %1556 = vset.pattern.permute.xlu0 1
    %1557 = vperm.xlu0 %1556, %v1056
    %v1558 = vpop.permute.xlu0 %1557
    %1560 = vset.pattern.permute.xlu0 1
    %1561 = vperm.xlu0 %1560, %v1057
    %v1562 = vpop.permute.xlu0 %1561
    %v1564 = vmul.f32 %v1469, %v1502
    %v1565 = vmul.f32 %v1471, %v1506
    %v1566 = vmul.f32 %v1473, %v1510
    %v1567 = vmul.f32 %v1475, %v1514
    %v1568 = vmul.f32 %v1477, %v1518
    %v1569 = vmul.f32 %v1479, %v1522
    %v1570 = vmul.f32 %v1481, %v1526
    %v1571 = vmul.f32 %v1483, %v1530
    %v1572 = vmul.f32 %v1485, %v1534
    %v1573 = vmul.f32 %v1487, %v1538
    %v1574 = vmul.f32 %v1489, %v1542
    %v1575 = vmul.f32 %v1491, %v1546
    %v1576 = vmul.f32 %v1493, %v1550
    %v1577 = vmul.f32 %v1495, %v1554
    %v1578 = vmul.f32 %v1497, %v1558
    %v1579 = vmul.f32 %v1499, %v1562
    %v1580 = vadd.f32 %v1564, %v1565
    %v1581 = vadd.f32 %v1580, %v1566
    %v1582 = vadd.f32 %v1581, %v1567
    %v1583 = vadd.f32 %v1582, %v1568
    %v1584 = vadd.f32 %v1583, %v1569
    %v1585 = vadd.f32 %v1584, %v1570
    %v1586 = vadd.f32 %v1585, %v1571
    %v1587 = vadd.f32 %v1586, %v1572
    %v1588 = vadd.f32 %v1587, %v1573
    %v1589 = vadd.f32 %v1588, %v1574
    %v1590 = vadd.f32 %v1589, %v1575
    %v1591 = vadd.f32 %v1590, %v1576
    %v1592 = vadd.f32 %v1591, %v1577
    %v1593 = vadd.f32 %v1592, %v1578
    %v1594 = vadd.f32 %v1593, %v1579
    %v1595 = vrot.slane %v1594, 4
    %v1596 = vadd.f32 %v1594, %v1595
    %v1597 = vrot.slane %v1596, 2
    %v1598 = vadd.f32 %v1596, %v1597
    %v1599 = vrot.slane %v1598, 1
    %v1600 = vadd.f32 %v1598, %v1599
    %v1601 = vadd.f32 %v1600, 0.0
    %v1602 = vadd.f32 %v1469, %v1471
    %v1603 = vadd.f32 %v1602, %v1473
    %v1604 = vadd.f32 %v1603, %v1475
    %v1605 = vadd.f32 %v1604, %v1477
    %v1606 = vadd.f32 %v1605, %v1479
    %v1607 = vadd.f32 %v1606, %v1481
    %v1608 = vadd.f32 %v1607, %v1483
    %v1609 = vadd.f32 %v1608, %v1485
    %v1610 = vadd.f32 %v1609, %v1487
    %v1611 = vadd.f32 %v1610, %v1489
    %v1612 = vadd.f32 %v1611, %v1491
    %v1613 = vadd.f32 %v1612, %v1493
    %v1614 = vadd.f32 %v1613, %v1495
    %v1615 = vadd.f32 %v1614, %v1497
    %v1616 = vadd.f32 %v1615, %v1499
    %v1617 = vrot.slane %v1616, 4
    %v1618 = vadd.f32 %v1616, %v1617
    %v1619 = vrot.slane %v1618, 2
    %v1620 = vadd.f32 %v1618, %v1619
    %v1621 = vrot.slane %v1620, 1
    %v1622 = vadd.f32 %v1620, %v1621
    %v1623 = vadd.f32 %v1622, 0.0
    %v1624 = vsel %vm869, %v1341, %v1601
    %v1625 = vsel %vm869, %v1363, %v1623
    %v1626 = vmul.f32 %v1071, %v897
    %v1627 = vsub.f32 %v1624, %v1626
    %v1628 = vrcp.pop %v1625
    %v1629 = vmul.f32 %v1627, %v1628
    %s1630 = sld [smem:[#allocation2 + $0x1]]
    %v1631 = vstv %s1630
    %v1632 = vmul.f32 %v1629, %v1631
    %v1633 = vadd.f32 %v879, %v1632
    %v1634 = vld [vmem:[%s3 + $0x2] sm:$0x1]
    %v1635 = vlaneseq
    %v1636 = vshrl.u32 %v1635, 7
    %v1637 = vsub.s32 0, %v1636
    %v1638 = vrot.slane %v1634, %v1637
    %v1639 = vmul.f32 %v43, %v1638
    %v1640 = vld [vmem:[%s4 + $0x2] sm:$0x1]
    %v1641 = vlaneseq
    %v1642 = vshrl.u32 %v1641, 7
    %v1643 = vsub.s32 0, %v1642
    %v1644 = vrot.slane %v1640, %v1643
    %v1645 = vmul.f32 %v43, %v1644
    %v1646 = vld [vmem:[%s5 + $0x2] sm:$0x1]
    %v1647 = vlaneseq
    %v1648 = vshrl.u32 %v1647, 7
    %v1649 = vsub.s32 0, %v1648
    %v1650 = vrot.slane %v1646, %v1649
    %v1651 = vmul.f32 %v43, %v1650
    %1652 = vset.pattern.permute.xlu0 2
    %1653 = vperm.xlu0 %1652, %v78
    %v1654 = vpop.permute.xlu0 %1653
    %1656 = vset.pattern.permute.xlu0 2
    %1657 = vperm.xlu0 %1656, %v79
    %v1658 = vpop.permute.xlu0 %1657
    %1660 = vset.pattern.permute.xlu0 2
    %1661 = vperm.xlu0 %1660, %v80
    %v1662 = vpop.permute.xlu0 %1661
    %1664 = vset.pattern.permute.xlu0 2
    %1665 = vperm.xlu0 %1664, %v81
    %v1666 = vpop.permute.xlu0 %1665
    %1668 = vset.pattern.permute.xlu0 2
    %1669 = vperm.xlu0 %1668, %v82
    %v1670 = vpop.permute.xlu0 %1669
    %1672 = vset.pattern.permute.xlu0 2
    %1673 = vperm.xlu0 %1672, %v83
    %v1674 = vpop.permute.xlu0 %1673
    %1676 = vset.pattern.permute.xlu0 2
    %1677 = vperm.xlu0 %1676, %v84
    %v1678 = vpop.permute.xlu0 %1677
    %1680 = vset.pattern.permute.xlu0 2
    %1681 = vperm.xlu0 %1680, %v85
    %v1682 = vpop.permute.xlu0 %1681
    %1684 = vset.pattern.permute.xlu0 2
    %1685 = vperm.xlu0 %1684, %v86
    %v1686 = vpop.permute.xlu0 %1685
    %1688 = vset.pattern.permute.xlu0 2
    %1689 = vperm.xlu0 %1688, %v87
    %v1690 = vpop.permute.xlu0 %1689
    %1692 = vset.pattern.permute.xlu0 2
    %1693 = vperm.xlu0 %1692, %v88
    %v1694 = vpop.permute.xlu0 %1693
    %1696 = vset.pattern.permute.xlu0 2
    %1697 = vperm.xlu0 %1696, %v89
    %v1698 = vpop.permute.xlu0 %1697
    %1700 = vset.pattern.permute.xlu0 2
    %1701 = vperm.xlu0 %1700, %v90
    %v1702 = vpop.permute.xlu0 %1701
    %1704 = vset.pattern.permute.xlu0 2
    %1705 = vperm.xlu0 %1704, %v91
    %v1706 = vpop.permute.xlu0 %1705
    %1708 = vset.pattern.permute.xlu0 2
    %1709 = vperm.xlu0 %1708, %v92
    %v1710 = vpop.permute.xlu0 %1709
    %1712 = vset.pattern.permute.xlu0 2
    %1713 = vperm.xlu0 %1712, %v93
    %v1714 = vpop.permute.xlu0 %1713
    %v1716 = vmul.f32 %v44, %v1654
    %v1717 = vmul.f32 %v45, %v1658
    %v1718 = vmul.f32 %v46, %v1662
    %v1719 = vmul.f32 %v47, %v1666
    %v1720 = vmul.f32 %v48, %v1670
    %v1721 = vmul.f32 %v49, %v1674
    %v1722 = vmul.f32 %v50, %v1678
    %v1723 = vmul.f32 %v51, %v1682
    %v1724 = vmul.f32 %v52, %v1686
    %v1725 = vmul.f32 %v53, %v1690
    %v1726 = vmul.f32 %v54, %v1694
    %v1727 = vmul.f32 %v55, %v1698
    %v1728 = vmul.f32 %v56, %v1702
    %v1729 = vmul.f32 %v57, %v1706
    %v1730 = vmul.f32 %v58, %v1710
    %v1731 = vmul.f32 %v59, %v1714
    %1732 = vset.pattern.permute.xlu0 2
    %1733 = vperm.xlu0 %1732, %v190
    %v1734 = vpop.permute.xlu0 %1733
    %1736 = vset.pattern.permute.xlu0 2
    %1737 = vperm.xlu0 %1736, %v191
    %v1738 = vpop.permute.xlu0 %1737
    %1740 = vset.pattern.permute.xlu0 2
    %1741 = vperm.xlu0 %1740, %v192
    %v1742 = vpop.permute.xlu0 %1741
    %1744 = vset.pattern.permute.xlu0 2
    %1745 = vperm.xlu0 %1744, %v193
    %v1746 = vpop.permute.xlu0 %1745
    %1748 = vset.pattern.permute.xlu0 2
    %1749 = vperm.xlu0 %1748, %v194
    %v1750 = vpop.permute.xlu0 %1749
    %1752 = vset.pattern.permute.xlu0 2
    %1753 = vperm.xlu0 %1752, %v195
    %v1754 = vpop.permute.xlu0 %1753
    %1756 = vset.pattern.permute.xlu0 2
    %1757 = vperm.xlu0 %1756, %v196
    %v1758 = vpop.permute.xlu0 %1757
    %1760 = vset.pattern.permute.xlu0 2
    %1761 = vperm.xlu0 %1760, %v197
    %v1762 = vpop.permute.xlu0 %1761
    %1764 = vset.pattern.permute.xlu0 2
    %1765 = vperm.xlu0 %1764, %v198
    %v1766 = vpop.permute.xlu0 %1765
    %1768 = vset.pattern.permute.xlu0 2
    %1769 = vperm.xlu0 %1768, %v199
    %v1770 = vpop.permute.xlu0 %1769
    %1772 = vset.pattern.permute.xlu0 2
    %1773 = vperm.xlu0 %1772, %v200
    %v1774 = vpop.permute.xlu0 %1773
    %1776 = vset.pattern.permute.xlu0 2
    %1777 = vperm.xlu0 %1776, %v201
    %v1778 = vpop.permute.xlu0 %1777
    %1780 = vset.pattern.permute.xlu0 2
    %1781 = vperm.xlu0 %1780, %v202
    %v1782 = vpop.permute.xlu0 %1781
    %1784 = vset.pattern.permute.xlu0 2
    %1785 = vperm.xlu0 %1784, %v203
    %v1786 = vpop.permute.xlu0 %1785
    %1788 = vset.pattern.permute.xlu0 2
    %1789 = vperm.xlu0 %1788, %v204
    %v1790 = vpop.permute.xlu0 %1789
    %1792 = vset.pattern.permute.xlu0 2
    %1793 = vperm.xlu0 %1792, %v205
    %v1794 = vpop.permute.xlu0 %1793
    %v1796 = vmul.f32 %v44, %v1734
    %v1797 = vmul.f32 %v45, %v1738
    %v1798 = vmul.f32 %v46, %v1742
    %v1799 = vmul.f32 %v47, %v1746
    %v1800 = vmul.f32 %v48, %v1750
    %v1801 = vmul.f32 %v49, %v1754
    %v1802 = vmul.f32 %v50, %v1758
    %v1803 = vmul.f32 %v51, %v1762
    %v1804 = vmul.f32 %v52, %v1766
    %v1805 = vmul.f32 %v53, %v1770
    %v1806 = vmul.f32 %v54, %v1774
    %v1807 = vmul.f32 %v55, %v1778
    %v1808 = vmul.f32 %v56, %v1782
    %v1809 = vmul.f32 %v57, %v1786
    %v1810 = vmul.f32 %v58, %v1790
    %v1811 = vmul.f32 %v59, %v1794
    %v1812 = vsel %vm302, %v1645, -inf
    %1813 = vmax.xlane.f32.xlu0 %v1812
    %v1814 = vpop.xlane.xlu0 %1813
    %v1815 = vsel %vm302, %v1645, inf
    %1816 = vmin.xlane.f32.xlu0 %v1815
    %v1817 = vpop.xlane.xlu0 %1816
    %vm1818 = vcmp.ge.f32.partialorder %v1639, 0.0
    %v1819 = vmul.f32 %v1639, %v1814
    %v1820 = vmul.f32 %v1639, %v1817
    %v1821 = vsel %vm1818, %v1819, %v1820
    %v1822 = vmul.f32 %v1639, %v1645
    %v1823 = vsub.f32 %v1822, %v1821
    %v1824 = vmul.f32 %v1823, 1.442695
    %v1825 = vpow.pop %v1824
    %1827 = vset.pattern.permute.xlu0 0
    %1828 = vperm.xlu0 %1827, %v1716
    %v1829 = vpop.permute.xlu0 %1828
    %1832 = vset.pattern.permute.xlu0 0
    %1833 = vperm.xlu0 %1832, %v1717
    %v1834 = vpop.permute.xlu0 %1833
    %1837 = vset.pattern.permute.xlu0 0
    %1838 = vperm.xlu0 %1837, %v1718
    %v1839 = vpop.permute.xlu0 %1838
    %1842 = vset.pattern.permute.xlu0 0
    %1843 = vperm.xlu0 %1842, %v1719
    %v1844 = vpop.permute.xlu0 %1843
    %1847 = vset.pattern.permute.xlu0 0
    %1848 = vperm.xlu0 %1847, %v1720
    %v1849 = vpop.permute.xlu0 %1848
    %1852 = vset.pattern.permute.xlu0 0
    %1853 = vperm.xlu0 %1852, %v1721
    %v1854 = vpop.permute.xlu0 %1853
    %1857 = vset.pattern.permute.xlu0 0
    %1858 = vperm.xlu0 %1857, %v1722
    %v1859 = vpop.permute.xlu0 %1858
    %1862 = vset.pattern.permute.xlu0 0
    %1863 = vperm.xlu0 %1862, %v1723
    %v1864 = vpop.permute.xlu0 %1863
    %1867 = vset.pattern.permute.xlu0 0
    %1868 = vperm.xlu0 %1867, %v1724
    %v1869 = vpop.permute.xlu0 %1868
    %1872 = vset.pattern.permute.xlu0 0
    %1873 = vperm.xlu0 %1872, %v1725
    %v1874 = vpop.permute.xlu0 %1873
    %1877 = vset.pattern.permute.xlu0 0
    %1878 = vperm.xlu0 %1877, %v1726
    %v1879 = vpop.permute.xlu0 %1878
    %1882 = vset.pattern.permute.xlu0 0
    %1883 = vperm.xlu0 %1882, %v1727
    %v1884 = vpop.permute.xlu0 %1883
    %1887 = vset.pattern.permute.xlu0 0
    %1888 = vperm.xlu0 %1887, %v1728
    %v1889 = vpop.permute.xlu0 %1888
    %1892 = vset.pattern.permute.xlu0 0
    %1893 = vperm.xlu0 %1892, %v1729
    %v1894 = vpop.permute.xlu0 %1893
    %1897 = vset.pattern.permute.xlu0 0
    %1898 = vperm.xlu0 %1897, %v1730
    %v1899 = vpop.permute.xlu0 %1898
    %1902 = vset.pattern.permute.xlu0 0
    %1903 = vperm.xlu0 %1902, %v1731
    %v1904 = vpop.permute.xlu0 %1903
    %v1906 = vlaneseq
    %v1907 = vshrl.u32 %v1906, 7
    %v1908 = vsub.s32 0, %v1907
    %v1909 = vrot.slane %v1639, %v1908
    %v1910 = vmul.f32 %v1829, %v1909
    %v1911 = vmul.f32 %v1834, %v1909
    %v1912 = vmul.f32 %v1839, %v1909
    %v1913 = vmul.f32 %v1844, %v1909
    %v1914 = vmul.f32 %v1849, %v1909
    %v1915 = vmul.f32 %v1854, %v1909
    %v1916 = vmul.f32 %v1859, %v1909
    %v1917 = vmul.f32 %v1864, %v1909
    %v1918 = vmul.f32 %v1869, %v1909
    %v1919 = vmul.f32 %v1874, %v1909
    %v1920 = vmul.f32 %v1879, %v1909
    %v1921 = vmul.f32 %v1884, %v1909
    %v1922 = vmul.f32 %v1889, %v1909
    %v1923 = vmul.f32 %v1894, %v1909
    %v1924 = vmul.f32 %v1899, %v1909
    %v1925 = vmul.f32 %v1904, %v1909
    %v1926 = vlaneseq
    %v1927 = vshrl.u32 %v1926, 7
    %v1928 = vsub.s32 0, %v1927
    %v1929 = vrot.slane %v1821, %v1928
    %v1930 = vsub.f32 %v1910, %v1929
    %v1931 = vsub.f32 %v1911, %v1929
    %v1932 = vsub.f32 %v1912, %v1929
    %v1933 = vsub.f32 %v1913, %v1929
    %v1934 = vsub.f32 %v1914, %v1929
    %v1935 = vsub.f32 %v1915, %v1929
    %v1936 = vsub.f32 %v1916, %v1929
    %v1937 = vsub.f32 %v1917, %v1929
    %v1938 = vsub.f32 %v1918, %v1929
    %v1939 = vsub.f32 %v1919, %v1929
    %v1940 = vsub.f32 %v1920, %v1929
    %v1941 = vsub.f32 %v1921, %v1929
    %v1942 = vsub.f32 %v1922, %v1929
    %v1943 = vsub.f32 %v1923, %v1929
    %v1944 = vsub.f32 %v1924, %v1929
    %v1945 = vsub.f32 %v1925, %v1929
    %v1946 = vmul.f32 %v1930, 1.442695
    %v1947 = vpow.pop %v1946
    %v1948 = vmul.f32 %v1931, 1.442695
    %v1949 = vpow.pop %v1948
    %v1950 = vmul.f32 %v1932, 1.442695
    %v1951 = vpow.pop %v1950
    %v1952 = vmul.f32 %v1933, 1.442695
    %v1953 = vpow.pop %v1952
    %v1954 = vmul.f32 %v1934, 1.442695
    %v1955 = vpow.pop %v1954
    %v1956 = vmul.f32 %v1935, 1.442695
    %v1957 = vpow.pop %v1956
    %v1958 = vmul.f32 %v1936, 1.442695
    %v1959 = vpow.pop %v1958
    %v1960 = vmul.f32 %v1937, 1.442695
    %v1961 = vpow.pop %v1960
    %v1962 = vmul.f32 %v1938, 1.442695
    %v1963 = vpow.pop %v1962
    %v1964 = vmul.f32 %v1939, 1.442695
    %v1965 = vpow.pop %v1964
    %v1966 = vmul.f32 %v1940, 1.442695
    %v1967 = vpow.pop %v1966
    %v1968 = vmul.f32 %v1941, 1.442695
    %v1969 = vpow.pop %v1968
    %v1970 = vmul.f32 %v1942, 1.442695
    %v1971 = vpow.pop %v1970
    %v1972 = vmul.f32 %v1943, 1.442695
    %v1973 = vpow.pop %v1972
    %v1974 = vmul.f32 %v1944, 1.442695
    %v1975 = vpow.pop %v1974
    %v1976 = vmul.f32 %v1945, 1.442695
    %v1977 = vpow.pop %v1976
    %1979 = vset.pattern.permute.xlu0 0
    %1980 = vperm.xlu0 %1979, %v1796
    %v1981 = vpop.permute.xlu0 %1980
    %1984 = vset.pattern.permute.xlu0 0
    %1985 = vperm.xlu0 %1984, %v1797
    %v1986 = vpop.permute.xlu0 %1985
    %1989 = vset.pattern.permute.xlu0 0
    %1990 = vperm.xlu0 %1989, %v1798
    %v1991 = vpop.permute.xlu0 %1990
    %1994 = vset.pattern.permute.xlu0 0
    %1995 = vperm.xlu0 %1994, %v1799
    %v1996 = vpop.permute.xlu0 %1995
    %1999 = vset.pattern.permute.xlu0 0
    %2000 = vperm.xlu0 %1999, %v1800
    %v2001 = vpop.permute.xlu0 %2000
    %2004 = vset.pattern.permute.xlu0 0
    %2005 = vperm.xlu0 %2004, %v1801
    %v2006 = vpop.permute.xlu0 %2005
    %2009 = vset.pattern.permute.xlu0 0
    %2010 = vperm.xlu0 %2009, %v1802
    %v2011 = vpop.permute.xlu0 %2010
    %2014 = vset.pattern.permute.xlu0 0
    %2015 = vperm.xlu0 %2014, %v1803
    %v2016 = vpop.permute.xlu0 %2015
    %2019 = vset.pattern.permute.xlu0 0
    %2020 = vperm.xlu0 %2019, %v1804
    %v2021 = vpop.permute.xlu0 %2020
    %2024 = vset.pattern.permute.xlu0 0
    %2025 = vperm.xlu0 %2024, %v1805
    %v2026 = vpop.permute.xlu0 %2025
    %2029 = vset.pattern.permute.xlu0 0
    %2030 = vperm.xlu0 %2029, %v1806
    %v2031 = vpop.permute.xlu0 %2030
    %2034 = vset.pattern.permute.xlu0 0
    %2035 = vperm.xlu0 %2034, %v1807
    %v2036 = vpop.permute.xlu0 %2035
    %2039 = vset.pattern.permute.xlu0 0
    %2040 = vperm.xlu0 %2039, %v1808
    %v2041 = vpop.permute.xlu0 %2040
    %2044 = vset.pattern.permute.xlu0 0
    %2045 = vperm.xlu0 %2044, %v1809
    %v2046 = vpop.permute.xlu0 %2045
    %2049 = vset.pattern.permute.xlu0 0
    %2050 = vperm.xlu0 %2049, %v1810
    %v2051 = vpop.permute.xlu0 %2050
    %2054 = vset.pattern.permute.xlu0 0
    %2055 = vperm.xlu0 %2054, %v1811
    %v2056 = vpop.permute.xlu0 %2055
    %v2058 = vmul.f32 %v1947, %v1981
    %v2059 = vmul.f32 %v1949, %v1986
    %v2060 = vmul.f32 %v1951, %v1991
    %v2061 = vmul.f32 %v1953, %v1996
    %v2062 = vmul.f32 %v1955, %v2001
    %v2063 = vmul.f32 %v1957, %v2006
    %v2064 = vmul.f32 %v1959, %v2011
    %v2065 = vmul.f32 %v1961, %v2016
    %v2066 = vmul.f32 %v1963, %v2021
    %v2067 = vmul.f32 %v1965, %v2026
    %v2068 = vmul.f32 %v1967, %v2031
    %v2069 = vmul.f32 %v1969, %v2036
    %v2070 = vmul.f32 %v1971, %v2041
    %v2071 = vmul.f32 %v1973, %v2046
    %v2072 = vmul.f32 %v1975, %v2051
    %v2073 = vmul.f32 %v1977, %v2056
    %v2074 = vadd.f32 %v2058, %v2059
    %v2075 = vadd.f32 %v2074, %v2060
    %v2076 = vadd.f32 %v2075, %v2061
    %v2077 = vadd.f32 %v2076, %v2062
    %v2078 = vadd.f32 %v2077, %v2063
    %v2079 = vadd.f32 %v2078, %v2064
    %v2080 = vadd.f32 %v2079, %v2065
    %v2081 = vadd.f32 %v2080, %v2066
    %v2082 = vadd.f32 %v2081, %v2067
    %v2083 = vadd.f32 %v2082, %v2068
    %v2084 = vadd.f32 %v2083, %v2069
    %v2085 = vadd.f32 %v2084, %v2070
    %v2086 = vadd.f32 %v2085, %v2071
    %v2087 = vadd.f32 %v2086, %v2072
    %v2088 = vadd.f32 %v2087, %v2073
    %v2089 = vrot.slane %v2088, 4
    %v2090 = vadd.f32 %v2088, %v2089
    %v2091 = vrot.slane %v2090, 2
    %v2092 = vadd.f32 %v2090, %v2091
    %v2093 = vrot.slane %v2092, 1
    %v2094 = vadd.f32 %v2092, %v2093
    %v2095 = vadd.f32 %v2094, 0.0
    %v2096 = vadd.f32 %v1947, %v1949
    %v2097 = vadd.f32 %v2096, %v1951
    %v2098 = vadd.f32 %v2097, %v1953
    %v2099 = vadd.f32 %v2098, %v1955
    %v2100 = vadd.f32 %v2099, %v1957
    %v2101 = vadd.f32 %v2100, %v1959
    %v2102 = vadd.f32 %v2101, %v1961
    %v2103 = vadd.f32 %v2102, %v1963
    %v2104 = vadd.f32 %v2103, %v1965
    %v2105 = vadd.f32 %v2104, %v1967
    %v2106 = vadd.f32 %v2105, %v1969
    %v2107 = vadd.f32 %v2106, %v1971
    %v2108 = vadd.f32 %v2107, %v1973
    %v2109 = vadd.f32 %v2108, %v1975
    %v2110 = vadd.f32 %v2109, %v1977
    %v2111 = vrot.slane %v2110, 4
    %v2112 = vadd.f32 %v2110, %v2111
    %v2113 = vrot.slane %v2112, 2
    %v2114 = vadd.f32 %v2112, %v2113
    %v2115 = vrot.slane %v2114, 1
    %v2116 = vadd.f32 %v2114, %v2115
    %v2117 = vadd.f32 %v2116, 0.0
    %2118 = vset.pattern.permute.xlu0 1
    %2119 = vperm.xlu0 %2118, %v1716
    %v2120 = vpop.permute.xlu0 %2119
    %2122 = vset.pattern.permute.xlu0 1
    %2123 = vperm.xlu0 %2122, %v1717
    %v2124 = vpop.permute.xlu0 %2123
    %2126 = vset.pattern.permute.xlu0 1
    %2127 = vperm.xlu0 %2126, %v1718
    %v2128 = vpop.permute.xlu0 %2127
    %2130 = vset.pattern.permute.xlu0 1
    %2131 = vperm.xlu0 %2130, %v1719
    %v2132 = vpop.permute.xlu0 %2131
    %2134 = vset.pattern.permute.xlu0 1
    %2135 = vperm.xlu0 %2134, %v1720
    %v2136 = vpop.permute.xlu0 %2135
    %2138 = vset.pattern.permute.xlu0 1
    %2139 = vperm.xlu0 %2138, %v1721
    %v2140 = vpop.permute.xlu0 %2139
    %2142 = vset.pattern.permute.xlu0 1
    %2143 = vperm.xlu0 %2142, %v1722
    %v2144 = vpop.permute.xlu0 %2143
    %2146 = vset.pattern.permute.xlu0 1
    %2147 = vperm.xlu0 %2146, %v1723
    %v2148 = vpop.permute.xlu0 %2147
    %2150 = vset.pattern.permute.xlu0 1
    %2151 = vperm.xlu0 %2150, %v1724
    %v2152 = vpop.permute.xlu0 %2151
    %2154 = vset.pattern.permute.xlu0 1
    %2155 = vperm.xlu0 %2154, %v1725
    %v2156 = vpop.permute.xlu0 %2155
    %2158 = vset.pattern.permute.xlu0 1
    %2159 = vperm.xlu0 %2158, %v1726
    %v2160 = vpop.permute.xlu0 %2159
    %2162 = vset.pattern.permute.xlu0 1
    %2163 = vperm.xlu0 %2162, %v1727
    %v2164 = vpop.permute.xlu0 %2163
    %2166 = vset.pattern.permute.xlu0 1
    %2167 = vperm.xlu0 %2166, %v1728
    %v2168 = vpop.permute.xlu0 %2167
    %2170 = vset.pattern.permute.xlu0 1
    %2171 = vperm.xlu0 %2170, %v1729
    %v2172 = vpop.permute.xlu0 %2171
    %2174 = vset.pattern.permute.xlu0 1
    %2175 = vperm.xlu0 %2174, %v1730
    %v2176 = vpop.permute.xlu0 %2175
    %2178 = vset.pattern.permute.xlu0 1
    %2179 = vperm.xlu0 %2178, %v1731
    %v2180 = vpop.permute.xlu0 %2179
    %v2182 = vlaneseq
    %v2183 = vshrl.u32 %v2182, 7
    %v2184 = vsub.s32 1, %v2183
    %v2185 = vrot.slane %v1639, %v2184
    %v2186 = vmul.f32 %v2120, %v2185
    %v2187 = vmul.f32 %v2124, %v2185
    %v2188 = vmul.f32 %v2128, %v2185
    %v2189 = vmul.f32 %v2132, %v2185
    %v2190 = vmul.f32 %v2136, %v2185
    %v2191 = vmul.f32 %v2140, %v2185
    %v2192 = vmul.f32 %v2144, %v2185
    %v2193 = vmul.f32 %v2148, %v2185
    %v2194 = vmul.f32 %v2152, %v2185
    %v2195 = vmul.f32 %v2156, %v2185
    %v2196 = vmul.f32 %v2160, %v2185
    %v2197 = vmul.f32 %v2164, %v2185
    %v2198 = vmul.f32 %v2168, %v2185
    %v2199 = vmul.f32 %v2172, %v2185
    %v2200 = vmul.f32 %v2176, %v2185
    %v2201 = vmul.f32 %v2180, %v2185
    %v2202 = vlaneseq
    %v2203 = vshrl.u32 %v2202, 7
    %v2204 = vsub.s32 1, %v2203
    %v2205 = vrot.slane %v1821, %v2204
    %v2206 = vsub.f32 %v2186, %v2205
    %v2207 = vsub.f32 %v2187, %v2205
    %v2208 = vsub.f32 %v2188, %v2205
    %v2209 = vsub.f32 %v2189, %v2205
    %v2210 = vsub.f32 %v2190, %v2205
    %v2211 = vsub.f32 %v2191, %v2205
    %v2212 = vsub.f32 %v2192, %v2205
    %v2213 = vsub.f32 %v2193, %v2205
    %v2214 = vsub.f32 %v2194, %v2205
    %v2215 = vsub.f32 %v2195, %v2205
    %v2216 = vsub.f32 %v2196, %v2205
    %v2217 = vsub.f32 %v2197, %v2205
    %v2218 = vsub.f32 %v2198, %v2205
    %v2219 = vsub.f32 %v2199, %v2205
    %v2220 = vsub.f32 %v2200, %v2205
    %v2221 = vsub.f32 %v2201, %v2205
    %v2222 = vmul.f32 %v2206, 1.442695
    %v2223 = vpow.pop %v2222
    %v2224 = vmul.f32 %v2207, 1.442695
    %v2225 = vpow.pop %v2224
    %v2226 = vmul.f32 %v2208, 1.442695
    %v2227 = vpow.pop %v2226
    %v2228 = vmul.f32 %v2209, 1.442695
    %v2229 = vpow.pop %v2228
    %v2230 = vmul.f32 %v2210, 1.442695
    %v2231 = vpow.pop %v2230
    %v2232 = vmul.f32 %v2211, 1.442695
    %v2233 = vpow.pop %v2232
    %v2234 = vmul.f32 %v2212, 1.442695
    %v2235 = vpow.pop %v2234
    %v2236 = vmul.f32 %v2213, 1.442695
    %v2237 = vpow.pop %v2236
    %v2238 = vmul.f32 %v2214, 1.442695
    %v2239 = vpow.pop %v2238
    %v2240 = vmul.f32 %v2215, 1.442695
    %v2241 = vpow.pop %v2240
    %v2242 = vmul.f32 %v2216, 1.442695
    %v2243 = vpow.pop %v2242
    %v2244 = vmul.f32 %v2217, 1.442695
    %v2245 = vpow.pop %v2244
    %v2246 = vmul.f32 %v2218, 1.442695
    %v2247 = vpow.pop %v2246
    %v2248 = vmul.f32 %v2219, 1.442695
    %v2249 = vpow.pop %v2248
    %v2250 = vmul.f32 %v2220, 1.442695
    %v2251 = vpow.pop %v2250
    %v2252 = vmul.f32 %v2221, 1.442695
    %v2253 = vpow.pop %v2252
    %2254 = vset.pattern.permute.xlu0 1
    %2255 = vperm.xlu0 %2254, %v1796
    %v2256 = vpop.permute.xlu0 %2255
    %2258 = vset.pattern.permute.xlu0 1
    %2259 = vperm.xlu0 %2258, %v1797
    %v2260 = vpop.permute.xlu0 %2259
    %2262 = vset.pattern.permute.xlu0 1
    %2263 = vperm.xlu0 %2262, %v1798
    %v2264 = vpop.permute.xlu0 %2263
    %2266 = vset.pattern.permute.xlu0 1
    %2267 = vperm.xlu0 %2266, %v1799
    %v2268 = vpop.permute.xlu0 %2267
    %2270 = vset.pattern.permute.xlu0 1
    %2271 = vperm.xlu0 %2270, %v1800
    %v2272 = vpop.permute.xlu0 %2271
    %2274 = vset.pattern.permute.xlu0 1
    %2275 = vperm.xlu0 %2274, %v1801
    %v2276 = vpop.permute.xlu0 %2275
    %2278 = vset.pattern.permute.xlu0 1
    %2279 = vperm.xlu0 %2278, %v1802
    %v2280 = vpop.permute.xlu0 %2279
    %2282 = vset.pattern.permute.xlu0 1
    %2283 = vperm.xlu0 %2282, %v1803
    %v2284 = vpop.permute.xlu0 %2283
    %2286 = vset.pattern.permute.xlu0 1
    %2287 = vperm.xlu0 %2286, %v1804
    %v2288 = vpop.permute.xlu0 %2287
    %2290 = vset.pattern.permute.xlu0 1
    %2291 = vperm.xlu0 %2290, %v1805
    %v2292 = vpop.permute.xlu0 %2291
    %2294 = vset.pattern.permute.xlu0 1
    %2295 = vperm.xlu0 %2294, %v1806
    %v2296 = vpop.permute.xlu0 %2295
    %2298 = vset.pattern.permute.xlu0 1
    %2299 = vperm.xlu0 %2298, %v1807
    %v2300 = vpop.permute.xlu0 %2299
    %2302 = vset.pattern.permute.xlu0 1
    %2303 = vperm.xlu0 %2302, %v1808
    %v2304 = vpop.permute.xlu0 %2303
    %2306 = vset.pattern.permute.xlu0 1
    %2307 = vperm.xlu0 %2306, %v1809
    %v2308 = vpop.permute.xlu0 %2307
    %2310 = vset.pattern.permute.xlu0 1
    %2311 = vperm.xlu0 %2310, %v1810
    %v2312 = vpop.permute.xlu0 %2311
    %2314 = vset.pattern.permute.xlu0 1
    %2315 = vperm.xlu0 %2314, %v1811
    %v2316 = vpop.permute.xlu0 %2315
    %v2318 = vmul.f32 %v2223, %v2256
    %v2319 = vmul.f32 %v2225, %v2260
    %v2320 = vmul.f32 %v2227, %v2264
    %v2321 = vmul.f32 %v2229, %v2268
    %v2322 = vmul.f32 %v2231, %v2272
    %v2323 = vmul.f32 %v2233, %v2276
    %v2324 = vmul.f32 %v2235, %v2280
    %v2325 = vmul.f32 %v2237, %v2284
    %v2326 = vmul.f32 %v2239, %v2288
    %v2327 = vmul.f32 %v2241, %v2292
    %v2328 = vmul.f32 %v2243, %v2296
    %v2329 = vmul.f32 %v2245, %v2300
    %v2330 = vmul.f32 %v2247, %v2304
    %v2331 = vmul.f32 %v2249, %v2308
    %v2332 = vmul.f32 %v2251, %v2312
    %v2333 = vmul.f32 %v2253, %v2316
    %v2334 = vadd.f32 %v2318, %v2319
    %v2335 = vadd.f32 %v2334, %v2320
    %v2336 = vadd.f32 %v2335, %v2321
    %v2337 = vadd.f32 %v2336, %v2322
    %v2338 = vadd.f32 %v2337, %v2323
    %v2339 = vadd.f32 %v2338, %v2324
    %v2340 = vadd.f32 %v2339, %v2325
    %v2341 = vadd.f32 %v2340, %v2326
    %v2342 = vadd.f32 %v2341, %v2327
    %v2343 = vadd.f32 %v2342, %v2328
    %v2344 = vadd.f32 %v2343, %v2329
    %v2345 = vadd.f32 %v2344, %v2330
    %v2346 = vadd.f32 %v2345, %v2331
    %v2347 = vadd.f32 %v2346, %v2332
    %v2348 = vadd.f32 %v2347, %v2333
    %v2349 = vrot.slane %v2348, 4
    %v2350 = vadd.f32 %v2348, %v2349
    %v2351 = vrot.slane %v2350, 2
    %v2352 = vadd.f32 %v2350, %v2351
    %v2353 = vrot.slane %v2352, 1
    %v2354 = vadd.f32 %v2352, %v2353
    %v2355 = vadd.f32 %v2354, 0.0
    %v2356 = vadd.f32 %v2223, %v2225
    %v2357 = vadd.f32 %v2356, %v2227
    %v2358 = vadd.f32 %v2357, %v2229
    %v2359 = vadd.f32 %v2358, %v2231
    %v2360 = vadd.f32 %v2359, %v2233
    %v2361 = vadd.f32 %v2360, %v2235
    %v2362 = vadd.f32 %v2361, %v2237
    %v2363 = vadd.f32 %v2362, %v2239
    %v2364 = vadd.f32 %v2363, %v2241
    %v2365 = vadd.f32 %v2364, %v2243
    %v2366 = vadd.f32 %v2365, %v2245
    %v2367 = vadd.f32 %v2366, %v2247
    %v2368 = vadd.f32 %v2367, %v2249
    %v2369 = vadd.f32 %v2368, %v2251
    %v2370 = vadd.f32 %v2369, %v2253
    %v2371 = vrot.slane %v2370, 4
    %v2372 = vadd.f32 %v2370, %v2371
    %v2373 = vrot.slane %v2372, 2
    %v2374 = vadd.f32 %v2372, %v2373
    %v2375 = vrot.slane %v2374, 1
    %v2376 = vadd.f32 %v2374, %v2375
    %v2377 = vadd.f32 %v2376, 0.0
    %v2378 = vsel %vm869, %v2095, %v2355
    %v2379 = vsel %vm869, %v2117, %v2377
    %v2380 = vmul.f32 %v1825, %v1651
    %v2381 = vsub.f32 %v2378, %v2380
    %v2382 = vrcp.pop %v2379
    %v2383 = vmul.f32 %v2381, %v2382
    %s2384 = sld [smem:[#allocation2 + $0x2]]
    %v2385 = vstv %s2384
    %v2386 = vmul.f32 %v2383, %v2385
    %v2387 = vadd.f32 %v1633, %v2386
    %v2388 = vld [vmem:[%s3 + $0x3] sm:$0x1]
    %v2389 = vlaneseq
    %v2390 = vshrl.u32 %v2389, 7
    %v2391 = vsub.s32 0, %v2390
    %v2392 = vrot.slane %v2388, %v2391
    %v2393 = vmul.f32 %v43, %v2392
    %v2394 = vld [vmem:[%s4 + $0x3] sm:$0x1]
    %v2395 = vlaneseq
    %v2396 = vshrl.u32 %v2395, 7
    %v2397 = vsub.s32 0, %v2396
    %v2398 = vrot.slane %v2394, %v2397
    %v2399 = vmul.f32 %v43, %v2398
    %v2400 = vld [vmem:[%s5 + $0x3] sm:$0x1]
    %v2401 = vlaneseq
    %v2402 = vshrl.u32 %v2401, 7
    %v2403 = vsub.s32 0, %v2402
    %v2404 = vrot.slane %v2400, %v2403
    %v2405 = vmul.f32 %v43, %v2404
    %2406 = vset.pattern.permute.xlu0 3
    %2407 = vperm.xlu0 %2406, %v78
    %v2408 = vpop.permute.xlu0 %2407
    %2410 = vset.pattern.permute.xlu0 3
    %2411 = vperm.xlu0 %2410, %v79
    %v2412 = vpop.permute.xlu0 %2411
    %2414 = vset.pattern.permute.xlu0 3
    %2415 = vperm.xlu0 %2414, %v80
    %v2416 = vpop.permute.xlu0 %2415
    %2418 = vset.pattern.permute.xlu0 3
    %2419 = vperm.xlu0 %2418, %v81
    %v2420 = vpop.permute.xlu0 %2419
    %2422 = vset.pattern.permute.xlu0 3
    %2423 = vperm.xlu0 %2422, %v82
    %v2424 = vpop.permute.xlu0 %2423
    %2426 = vset.pattern.permute.xlu0 3
    %2427 = vperm.xlu0 %2426, %v83
    %v2428 = vpop.permute.xlu0 %2427
    %2430 = vset.pattern.permute.xlu0 3
    %2431 = vperm.xlu0 %2430, %v84
    %v2432 = vpop.permute.xlu0 %2431
    %2434 = vset.pattern.permute.xlu0 3
    %2435 = vperm.xlu0 %2434, %v85
    %v2436 = vpop.permute.xlu0 %2435
    %2438 = vset.pattern.permute.xlu0 3
    %2439 = vperm.xlu0 %2438, %v86
    %v2440 = vpop.permute.xlu0 %2439
    %2442 = vset.pattern.permute.xlu0 3
    %2443 = vperm.xlu0 %2442, %v87
    %v2444 = vpop.permute.xlu0 %2443
    %2446 = vset.pattern.permute.xlu0 3
    %2447 = vperm.xlu0 %2446, %v88
    %v2448 = vpop.permute.xlu0 %2447
    %2450 = vset.pattern.permute.xlu0 3
    %2451 = vperm.xlu0 %2450, %v89
    %v2452 = vpop.permute.xlu0 %2451
    %2454 = vset.pattern.permute.xlu0 3
    %2455 = vperm.xlu0 %2454, %v90
    %v2456 = vpop.permute.xlu0 %2455
    %2458 = vset.pattern.permute.xlu0 3
    %2459 = vperm.xlu0 %2458, %v91
    %v2460 = vpop.permute.xlu0 %2459
    %2462 = vset.pattern.permute.xlu0 3
    %2463 = vperm.xlu0 %2462, %v92
    %v2464 = vpop.permute.xlu0 %2463
    %2466 = vset.pattern.permute.xlu0 3
    %2467 = vperm.xlu0 %2466, %v93
    %v2468 = vpop.permute.xlu0 %2467
    %v2470 = vmul.f32 %v44, %v2408
    %v2471 = vmul.f32 %v45, %v2412
    %v2472 = vmul.f32 %v46, %v2416
    %v2473 = vmul.f32 %v47, %v2420
    %v2474 = vmul.f32 %v48, %v2424
    %v2475 = vmul.f32 %v49, %v2428
    %v2476 = vmul.f32 %v50, %v2432
    %v2477 = vmul.f32 %v51, %v2436
    %v2478 = vmul.f32 %v52, %v2440
    %v2479 = vmul.f32 %v53, %v2444
    %v2480 = vmul.f32 %v54, %v2448
    %v2481 = vmul.f32 %v55, %v2452
    %v2482 = vmul.f32 %v56, %v2456
    %v2483 = vmul.f32 %v57, %v2460
    %v2484 = vmul.f32 %v58, %v2464
    %v2485 = vmul.f32 %v59, %v2468
    %2486 = vset.pattern.permute.xlu0 3
    %2487 = vperm.xlu0 %2486, %v190
    %v2488 = vpop.permute.xlu0 %2487
    %2490 = vset.pattern.permute.xlu0 3
    %2491 = vperm.xlu0 %2490, %v191
    %v2492 = vpop.permute.xlu0 %2491
    %2494 = vset.pattern.permute.xlu0 3
    %2495 = vperm.xlu0 %2494, %v192
    %v2496 = vpop.permute.xlu0 %2495
    %2498 = vset.pattern.permute.xlu0 3
    %2499 = vperm.xlu0 %2498, %v193
    %v2500 = vpop.permute.xlu0 %2499
    %2502 = vset.pattern.permute.xlu0 3
    %2503 = vperm.xlu0 %2502, %v194
    %v2504 = vpop.permute.xlu0 %2503
    %2506 = vset.pattern.permute.xlu0 3
    %2507 = vperm.xlu0 %2506, %v195
    %v2508 = vpop.permute.xlu0 %2507
    %2510 = vset.pattern.permute.xlu0 3
    %2511 = vperm.xlu0 %2510, %v196
    %v2512 = vpop.permute.xlu0 %2511
    %2514 = vset.pattern.permute.xlu0 3
    %2515 = vperm.xlu0 %2514, %v197
    %v2516 = vpop.permute.xlu0 %2515
    %2518 = vset.pattern.permute.xlu0 3
    %2519 = vperm.xlu0 %2518, %v198
    %v2520 = vpop.permute.xlu0 %2519
    %2522 = vset.pattern.permute.xlu0 3
    %2523 = vperm.xlu0 %2522, %v199
    %v2524 = vpop.permute.xlu0 %2523
    %2526 = vset.pattern.permute.xlu0 3
    %2527 = vperm.xlu0 %2526, %v200
    %v2528 = vpop.permute.xlu0 %2527
    %2530 = vset.pattern.permute.xlu0 3
    %2531 = vperm.xlu0 %2530, %v201
    %v2532 = vpop.permute.xlu0 %2531
    %2534 = vset.pattern.permute.xlu0 3
    %2535 = vperm.xlu0 %2534, %v202
    %v2536 = vpop.permute.xlu0 %2535
    %2538 = vset.pattern.permute.xlu0 3
    %2539 = vperm.xlu0 %2538, %v203
    %v2540 = vpop.permute.xlu0 %2539
    %2542 = vset.pattern.permute.xlu0 3
    %2543 = vperm.xlu0 %2542, %v204
    %v2544 = vpop.permute.xlu0 %2543
    %2546 = vset.pattern.permute.xlu0 3
    %2547 = vperm.xlu0 %2546, %v205
    %v2548 = vpop.permute.xlu0 %2547
    %v2550 = vmul.f32 %v44, %v2488
    %v2551 = vmul.f32 %v45, %v2492
    %v2552 = vmul.f32 %v46, %v2496
    %v2553 = vmul.f32 %v47, %v2500
    %v2554 = vmul.f32 %v48, %v2504
    %v2555 = vmul.f32 %v49, %v2508
    %v2556 = vmul.f32 %v50, %v2512
    %v2557 = vmul.f32 %v51, %v2516
    %v2558 = vmul.f32 %v52, %v2520
    %v2559 = vmul.f32 %v53, %v2524
    %v2560 = vmul.f32 %v54, %v2528
    %v2561 = vmul.f32 %v55, %v2532
    %v2562 = vmul.f32 %v56, %v2536
    %v2563 = vmul.f32 %v57, %v2540
    %v2564 = vmul.f32 %v58, %v2544
    %v2565 = vmul.f32 %v59, %v2548
    %v2566 = vsel %vm302, %v2399, -inf
    %2567 = vmax.xlane.f32.xlu0 %v2566
    %v2568 = vpop.xlane.xlu0 %2567
    %v2569 = vsel %vm302, %v2399, inf
    %2570 = vmin.xlane.f32.xlu0 %v2569
    %v2571 = vpop.xlane.xlu0 %2570
    %vm2572 = vcmp.ge.f32.partialorder %v2393, 0.0
    %v2573 = vmul.f32 %v2393, %v2568
    %v2574 = vmul.f32 %v2393, %v2571
    %v2575 = vsel %vm2572, %v2573, %v2574
    %v2576 = vmul.f32 %v2393, %v2399
    %v2577 = vsub.f32 %v2576, %v2575
    %v2578 = vmul.f32 %v2577, 1.442695
    %v2579 = vpow.pop %v2578
    %2581 = vset.pattern.permute.xlu0 0
    %2582 = vperm.xlu0 %2581, %v2470
    %v2583 = vpop.permute.xlu0 %2582
    %2586 = vset.pattern.permute.xlu0 0
    %2587 = vperm.xlu0 %2586, %v2471
    %v2588 = vpop.permute.xlu0 %2587
    %2591 = vset.pattern.permute.xlu0 0
    %2592 = vperm.xlu0 %2591, %v2472
    %v2593 = vpop.permute.xlu0 %2592
    %2596 = vset.pattern.permute.xlu0 0
    %2597 = vperm.xlu0 %2596, %v2473
    %v2598 = vpop.permute.xlu0 %2597
    %2601 = vset.pattern.permute.xlu0 0
    %2602 = vperm.xlu0 %2601, %v2474
    %v2603 = vpop.permute.xlu0 %2602
    %2606 = vset.pattern.permute.xlu0 0
    %2607 = vperm.xlu0 %2606, %v2475
    %v2608 = vpop.permute.xlu0 %2607
    %2611 = vset.pattern.permute.xlu0 0
    %2612 = vperm.xlu0 %2611, %v2476
    %v2613 = vpop.permute.xlu0 %2612
    %2616 = vset.pattern.permute.xlu0 0
    %2617 = vperm.xlu0 %2616, %v2477
    %v2618 = vpop.permute.xlu0 %2617
    %2621 = vset.pattern.permute.xlu0 0
    %2622 = vperm.xlu0 %2621, %v2478
    %v2623 = vpop.permute.xlu0 %2622
    %2626 = vset.pattern.permute.xlu0 0
    %2627 = vperm.xlu0 %2626, %v2479
    %v2628 = vpop.permute.xlu0 %2627
    %2631 = vset.pattern.permute.xlu0 0
    %2632 = vperm.xlu0 %2631, %v2480
    %v2633 = vpop.permute.xlu0 %2632
    %2636 = vset.pattern.permute.xlu0 0
    %2637 = vperm.xlu0 %2636, %v2481
    %v2638 = vpop.permute.xlu0 %2637
    %2641 = vset.pattern.permute.xlu0 0
    %2642 = vperm.xlu0 %2641, %v2482
    %v2643 = vpop.permute.xlu0 %2642
    %2646 = vset.pattern.permute.xlu0 0
    %2647 = vperm.xlu0 %2646, %v2483
    %v2648 = vpop.permute.xlu0 %2647
    %2651 = vset.pattern.permute.xlu0 0
    %2652 = vperm.xlu0 %2651, %v2484
    %v2653 = vpop.permute.xlu0 %2652
    %2656 = vset.pattern.permute.xlu0 0
    %2657 = vperm.xlu0 %2656, %v2485
    %v2658 = vpop.permute.xlu0 %2657
    %v2660 = vlaneseq
    %v2661 = vshrl.u32 %v2660, 7
    %v2662 = vsub.s32 0, %v2661
    %v2663 = vrot.slane %v2393, %v2662
    %v2664 = vmul.f32 %v2583, %v2663
    %v2665 = vmul.f32 %v2588, %v2663
    %v2666 = vmul.f32 %v2593, %v2663
    %v2667 = vmul.f32 %v2598, %v2663
    %v2668 = vmul.f32 %v2603, %v2663
    %v2669 = vmul.f32 %v2608, %v2663
    %v2670 = vmul.f32 %v2613, %v2663
    %v2671 = vmul.f32 %v2618, %v2663
    %v2672 = vmul.f32 %v2623, %v2663
    %v2673 = vmul.f32 %v2628, %v2663
    %v2674 = vmul.f32 %v2633, %v2663
    %v2675 = vmul.f32 %v2638, %v2663
    %v2676 = vmul.f32 %v2643, %v2663
    %v2677 = vmul.f32 %v2648, %v2663
    %v2678 = vmul.f32 %v2653, %v2663
    %v2679 = vmul.f32 %v2658, %v2663
    %v2680 = vlaneseq
    %v2681 = vshrl.u32 %v2680, 7
    %v2682 = vsub.s32 0, %v2681
    %v2683 = vrot.slane %v2575, %v2682
    %v2684 = vsub.f32 %v2664, %v2683
    %v2685 = vsub.f32 %v2665, %v2683
    %v2686 = vsub.f32 %v2666, %v2683
    %v2687 = vsub.f32 %v2667, %v2683
    %v2688 = vsub.f32 %v2668, %v2683
    %v2689 = vsub.f32 %v2669, %v2683
    %v2690 = vsub.f32 %v2670, %v2683
    %v2691 = vsub.f32 %v2671, %v2683
    %v2692 = vsub.f32 %v2672, %v2683
    %v2693 = vsub.f32 %v2673, %v2683
    %v2694 = vsub.f32 %v2674, %v2683
    %v2695 = vsub.f32 %v2675, %v2683
    %v2696 = vsub.f32 %v2676, %v2683
    %v2697 = vsub.f32 %v2677, %v2683
    %v2698 = vsub.f32 %v2678, %v2683
    %v2699 = vsub.f32 %v2679, %v2683
    %v2700 = vmul.f32 %v2684, 1.442695
    %v2701 = vpow.pop %v2700
    %v2702 = vmul.f32 %v2685, 1.442695
    %v2703 = vpow.pop %v2702
    %v2704 = vmul.f32 %v2686, 1.442695
    %v2705 = vpow.pop %v2704
    %v2706 = vmul.f32 %v2687, 1.442695
    %v2707 = vpow.pop %v2706
    %v2708 = vmul.f32 %v2688, 1.442695
    %v2709 = vpow.pop %v2708
    %v2710 = vmul.f32 %v2689, 1.442695
    %v2711 = vpow.pop %v2710
    %v2712 = vmul.f32 %v2690, 1.442695
    %v2713 = vpow.pop %v2712
    %v2714 = vmul.f32 %v2691, 1.442695
    %v2715 = vpow.pop %v2714
    %v2716 = vmul.f32 %v2692, 1.442695
    %v2717 = vpow.pop %v2716
    %v2718 = vmul.f32 %v2693, 1.442695
    %v2719 = vpow.pop %v2718
    %v2720 = vmul.f32 %v2694, 1.442695
    %v2721 = vpow.pop %v2720
    %v2722 = vmul.f32 %v2695, 1.442695
    %v2723 = vpow.pop %v2722
    %v2724 = vmul.f32 %v2696, 1.442695
    %v2725 = vpow.pop %v2724
    %v2726 = vmul.f32 %v2697, 1.442695
    %v2727 = vpow.pop %v2726
    %v2728 = vmul.f32 %v2698, 1.442695
    %v2729 = vpow.pop %v2728
    %v2730 = vmul.f32 %v2699, 1.442695
    %v2731 = vpow.pop %v2730
    %2733 = vset.pattern.permute.xlu0 0
    %2734 = vperm.xlu0 %2733, %v2550
    %v2735 = vpop.permute.xlu0 %2734
    %2738 = vset.pattern.permute.xlu0 0
    %2739 = vperm.xlu0 %2738, %v2551
    %v2740 = vpop.permute.xlu0 %2739
    %2743 = vset.pattern.permute.xlu0 0
    %2744 = vperm.xlu0 %2743, %v2552
    %v2745 = vpop.permute.xlu0 %2744
    %2748 = vset.pattern.permute.xlu0 0
    %2749 = vperm.xlu0 %2748, %v2553
    %v2750 = vpop.permute.xlu0 %2749
    %2753 = vset.pattern.permute.xlu0 0
    %2754 = vperm.xlu0 %2753, %v2554
    %v2755 = vpop.permute.xlu0 %2754
    %2758 = vset.pattern.permute.xlu0 0
    %2759 = vperm.xlu0 %2758, %v2555
    %v2760 = vpop.permute.xlu0 %2759
    %2763 = vset.pattern.permute.xlu0 0
    %2764 = vperm.xlu0 %2763, %v2556
    %v2765 = vpop.permute.xlu0 %2764
    %2768 = vset.pattern.permute.xlu0 0
    %2769 = vperm.xlu0 %2768, %v2557
    %v2770 = vpop.permute.xlu0 %2769
    %2773 = vset.pattern.permute.xlu0 0
    %2774 = vperm.xlu0 %2773, %v2558
    %v2775 = vpop.permute.xlu0 %2774
    %2778 = vset.pattern.permute.xlu0 0
    %2779 = vperm.xlu0 %2778, %v2559
    %v2780 = vpop.permute.xlu0 %2779
    %2783 = vset.pattern.permute.xlu0 0
    %2784 = vperm.xlu0 %2783, %v2560
    %v2785 = vpop.permute.xlu0 %2784
    %2788 = vset.pattern.permute.xlu0 0
    %2789 = vperm.xlu0 %2788, %v2561
    %v2790 = vpop.permute.xlu0 %2789
    %2793 = vset.pattern.permute.xlu0 0
    %2794 = vperm.xlu0 %2793, %v2562
    %v2795 = vpop.permute.xlu0 %2794
    %2798 = vset.pattern.permute.xlu0 0
    %2799 = vperm.xlu0 %2798, %v2563
    %v2800 = vpop.permute.xlu0 %2799
    %2803 = vset.pattern.permute.xlu0 0
    %2804 = vperm.xlu0 %2803, %v2564
    %v2805 = vpop.permute.xlu0 %2804
    %2808 = vset.pattern.permute.xlu0 0
    %2809 = vperm.xlu0 %2808, %v2565
    %v2810 = vpop.permute.xlu0 %2809
    %v2812 = vmul.f32 %v2701, %v2735
    %v2813 = vmul.f32 %v2703, %v2740
    %v2814 = vmul.f32 %v2705, %v2745
    %v2815 = vmul.f32 %v2707, %v2750
    %v2816 = vmul.f32 %v2709, %v2755
    %v2817 = vmul.f32 %v2711, %v2760
    %v2818 = vmul.f32 %v2713, %v2765
    %v2819 = vmul.f32 %v2715, %v2770
    %v2820 = vmul.f32 %v2717, %v2775
    %v2821 = vmul.f32 %v2719, %v2780
    %v2822 = vmul.f32 %v2721, %v2785
    %v2823 = vmul.f32 %v2723, %v2790
    %v2824 = vmul.f32 %v2725, %v2795
    %v2825 = vmul.f32 %v2727, %v2800
    %v2826 = vmul.f32 %v2729, %v2805
    %v2827 = vmul.f32 %v2731, %v2810
    %v2828 = vadd.f32 %v2812, %v2813
    %v2829 = vadd.f32 %v2828, %v2814
    %v2830 = vadd.f32 %v2829, %v2815
    %v2831 = vadd.f32 %v2830, %v2816
    %v2832 = vadd.f32 %v2831, %v2817
    %v2833 = vadd.f32 %v2832, %v2818
    %v2834 = vadd.f32 %v2833, %v2819
    %v2835 = vadd.f32 %v2834, %v2820
    %v2836 = vadd.f32 %v2835, %v2821
    %v2837 = vadd.f32 %v2836, %v2822
    %v2838 = vadd.f32 %v2837, %v2823
    %v2839 = vadd.f32 %v2838, %v2824
    %v2840 = vadd.f32 %v2839, %v2825
    %v2841 = vadd.f32 %v2840, %v2826
    %v2842 = vadd.f32 %v2841, %v2827
    %v2843 = vrot.slane %v2842, 4
    %v2844 = vadd.f32 %v2842, %v2843
    %v2845 = vrot.slane %v2844, 2
    %v2846 = vadd.f32 %v2844, %v2845
    %v2847 = vrot.slane %v2846, 1
    %v2848 = vadd.f32 %v2846, %v2847
    %v2849 = vadd.f32 %v2848, 0.0
    %v2850 = vadd.f32 %v2701, %v2703
    %v2851 = vadd.f32 %v2850, %v2705
    %v2852 = vadd.f32 %v2851, %v2707
    %v2853 = vadd.f32 %v2852, %v2709
    %v2854 = vadd.f32 %v2853, %v2711
    %v2855 = vadd.f32 %v2854, %v2713
    %v2856 = vadd.f32 %v2855, %v2715
    %v2857 = vadd.f32 %v2856, %v2717
    %v2858 = vadd.f32 %v2857, %v2719
    %v2859 = vadd.f32 %v2858, %v2721
    %v2860 = vadd.f32 %v2859, %v2723
    %v2861 = vadd.f32 %v2860, %v2725
    %v2862 = vadd.f32 %v2861, %v2727
    %v2863 = vadd.f32 %v2862, %v2729
    %v2864 = vadd.f32 %v2863, %v2731
    %v2865 = vrot.slane %v2864, 4
    %v2866 = vadd.f32 %v2864, %v2865
    %v2867 = vrot.slane %v2866, 2
    %v2868 = vadd.f32 %v2866, %v2867
    %v2869 = vrot.slane %v2868, 1
    %v2870 = vadd.f32 %v2868, %v2869
    %v2871 = vadd.f32 %v2870, 0.0
    %2872 = vset.pattern.permute.xlu0 1
    %2873 = vperm.xlu0 %2872, %v2470
    %v2874 = vpop.permute.xlu0 %2873
    %2876 = vset.pattern.permute.xlu0 1
    %2877 = vperm.xlu0 %2876, %v2471
    %v2878 = vpop.permute.xlu0 %2877
    %2880 = vset.pattern.permute.xlu0 1
    %2881 = vperm.xlu0 %2880, %v2472
    %v2882 = vpop.permute.xlu0 %2881
    %2884 = vset.pattern.permute.xlu0 1
    %2885 = vperm.xlu0 %2884, %v2473
    %v2886 = vpop.permute.xlu0 %2885
    %2888 = vset.pattern.permute.xlu0 1
    %2889 = vperm.xlu0 %2888, %v2474
    %v2890 = vpop.permute.xlu0 %2889
    %2892 = vset.pattern.permute.xlu0 1
    %2893 = vperm.xlu0 %2892, %v2475
    %v2894 = vpop.permute.xlu0 %2893
    %2896 = vset.pattern.permute.xlu0 1
    %2897 = vperm.xlu0 %2896, %v2476
    %v2898 = vpop.permute.xlu0 %2897
    %2900 = vset.pattern.permute.xlu0 1
    %2901 = vperm.xlu0 %2900, %v2477
    %v2902 = vpop.permute.xlu0 %2901
    %2904 = vset.pattern.permute.xlu0 1
    %2905 = vperm.xlu0 %2904, %v2478
    %v2906 = vpop.permute.xlu0 %2905
    %2908 = vset.pattern.permute.xlu0 1
    %2909 = vperm.xlu0 %2908, %v2479
    %v2910 = vpop.permute.xlu0 %2909
    %2912 = vset.pattern.permute.xlu0 1
    %2913 = vperm.xlu0 %2912, %v2480
    %v2914 = vpop.permute.xlu0 %2913
    %2916 = vset.pattern.permute.xlu0 1
    %2917 = vperm.xlu0 %2916, %v2481
    %v2918 = vpop.permute.xlu0 %2917
    %2920 = vset.pattern.permute.xlu0 1
    %2921 = vperm.xlu0 %2920, %v2482
    %v2922 = vpop.permute.xlu0 %2921
    %2924 = vset.pattern.permute.xlu0 1
    %2925 = vperm.xlu0 %2924, %v2483
    %v2926 = vpop.permute.xlu0 %2925
    %2928 = vset.pattern.permute.xlu0 1
    %2929 = vperm.xlu0 %2928, %v2484
    %v2930 = vpop.permute.xlu0 %2929
    %2932 = vset.pattern.permute.xlu0 1
    %2933 = vperm.xlu0 %2932, %v2485
    %v2934 = vpop.permute.xlu0 %2933
    %v2936 = vlaneseq
    %v2937 = vshrl.u32 %v2936, 7
    %v2938 = vsub.s32 1, %v2937
    %v2939 = vrot.slane %v2393, %v2938
    %v2940 = vmul.f32 %v2874, %v2939
    %v2941 = vmul.f32 %v2878, %v2939
    %v2942 = vmul.f32 %v2882, %v2939
    %v2943 = vmul.f32 %v2886, %v2939
    %v2944 = vmul.f32 %v2890, %v2939
    %v2945 = vmul.f32 %v2894, %v2939
    %v2946 = vmul.f32 %v2898, %v2939
    %v2947 = vmul.f32 %v2902, %v2939
    %v2948 = vmul.f32 %v2906, %v2939
    %v2949 = vmul.f32 %v2910, %v2939
    %v2950 = vmul.f32 %v2914, %v2939
    %v2951 = vmul.f32 %v2918, %v2939
    %v2952 = vmul.f32 %v2922, %v2939
    %v2953 = vmul.f32 %v2926, %v2939
    %v2954 = vmul.f32 %v2930, %v2939
    %v2955 = vmul.f32 %v2934, %v2939
    %v2956 = vlaneseq
    %v2957 = vshrl.u32 %v2956, 7
    %v2958 = vsub.s32 1, %v2957
    %v2959 = vrot.slane %v2575, %v2958
    %v2960 = vsub.f32 %v2940, %v2959
    %v2961 = vsub.f32 %v2941, %v2959
    %v2962 = vsub.f32 %v2942, %v2959
    %v2963 = vsub.f32 %v2943, %v2959
    %v2964 = vsub.f32 %v2944, %v2959
    %v2965 = vsub.f32 %v2945, %v2959
    %v2966 = vsub.f32 %v2946, %v2959
    %v2967 = vsub.f32 %v2947, %v2959
    %v2968 = vsub.f32 %v2948, %v2959
    %v2969 = vsub.f32 %v2949, %v2959
    %v2970 = vsub.f32 %v2950, %v2959
    %v2971 = vsub.f32 %v2951, %v2959
    %v2972 = vsub.f32 %v2952, %v2959
    %v2973 = vsub.f32 %v2953, %v2959
    %v2974 = vsub.f32 %v2954, %v2959
    %v2975 = vsub.f32 %v2955, %v2959
    %v2976 = vmul.f32 %v2960, 1.442695
    %v2977 = vpow.pop %v2976
    %v2978 = vmul.f32 %v2961, 1.442695
    %v2979 = vpow.pop %v2978
    %v2980 = vmul.f32 %v2962, 1.442695
    %v2981 = vpow.pop %v2980
    %v2982 = vmul.f32 %v2963, 1.442695
    %v2983 = vpow.pop %v2982
    %v2984 = vmul.f32 %v2964, 1.442695
    %v2985 = vpow.pop %v2984
    %v2986 = vmul.f32 %v2965, 1.442695
    %v2987 = vpow.pop %v2986
    %v2988 = vmul.f32 %v2966, 1.442695
    %v2989 = vpow.pop %v2988
    %v2990 = vmul.f32 %v2967, 1.442695
    %v2991 = vpow.pop %v2990
    %v2992 = vmul.f32 %v2968, 1.442695
    %v2993 = vpow.pop %v2992
    %v2994 = vmul.f32 %v2969, 1.442695
    %v2995 = vpow.pop %v2994
    %v2996 = vmul.f32 %v2970, 1.442695
    %v2997 = vpow.pop %v2996
    %v2998 = vmul.f32 %v2971, 1.442695
    %v2999 = vpow.pop %v2998
    %v3000 = vmul.f32 %v2972, 1.442695
    %v3001 = vpow.pop %v3000
    %v3002 = vmul.f32 %v2973, 1.442695
    %v3003 = vpow.pop %v3002
    %v3004 = vmul.f32 %v2974, 1.442695
    %v3005 = vpow.pop %v3004
    %v3006 = vmul.f32 %v2975, 1.442695
    %v3007 = vpow.pop %v3006
    %3008 = vset.pattern.permute.xlu0 1
    %3009 = vperm.xlu0 %3008, %v2550
    %v3010 = vpop.permute.xlu0 %3009
    %3012 = vset.pattern.permute.xlu0 1
    %3013 = vperm.xlu0 %3012, %v2551
    %v3014 = vpop.permute.xlu0 %3013
    %3016 = vset.pattern.permute.xlu0 1
    %3017 = vperm.xlu0 %3016, %v2552
    %v3018 = vpop.permute.xlu0 %3017
    %3020 = vset.pattern.permute.xlu0 1
    %3021 = vperm.xlu0 %3020, %v2553
    %v3022 = vpop.permute.xlu0 %3021
    %3024 = vset.pattern.permute.xlu0 1
    %3025 = vperm.xlu0 %3024, %v2554
    %v3026 = vpop.permute.xlu0 %3025
    %3028 = vset.pattern.permute.xlu0 1
    %3029 = vperm.xlu0 %3028, %v2555
    %v3030 = vpop.permute.xlu0 %3029
    %3032 = vset.pattern.permute.xlu0 1
    %3033 = vperm.xlu0 %3032, %v2556
    %v3034 = vpop.permute.xlu0 %3033
    %3036 = vset.pattern.permute.xlu0 1
    %3037 = vperm.xlu0 %3036, %v2557
    %v3038 = vpop.permute.xlu0 %3037
    %3040 = vset.pattern.permute.xlu0 1
    %3041 = vperm.xlu0 %3040, %v2558
    %v3042 = vpop.permute.xlu0 %3041
    %3044 = vset.pattern.permute.xlu0 1
    %3045 = vperm.xlu0 %3044, %v2559
    %v3046 = vpop.permute.xlu0 %3045
    %3048 = vset.pattern.permute.xlu0 1
    %3049 = vperm.xlu0 %3048, %v2560
    %v3050 = vpop.permute.xlu0 %3049
    %3052 = vset.pattern.permute.xlu0 1
    %3053 = vperm.xlu0 %3052, %v2561
    %v3054 = vpop.permute.xlu0 %3053
    %3056 = vset.pattern.permute.xlu0 1
    %3057 = vperm.xlu0 %3056, %v2562
    %v3058 = vpop.permute.xlu0 %3057
    %3060 = vset.pattern.permute.xlu0 1
    %3061 = vperm.xlu0 %3060, %v2563
    %v3062 = vpop.permute.xlu0 %3061
    %3064 = vset.pattern.permute.xlu0 1
    %3065 = vperm.xlu0 %3064, %v2564
    %v3066 = vpop.permute.xlu0 %3065
    %3068 = vset.pattern.permute.xlu0 1
    %3069 = vperm.xlu0 %3068, %v2565
    %v3070 = vpop.permute.xlu0 %3069
    %v3072 = vmul.f32 %v2977, %v3010
    %v3073 = vmul.f32 %v2979, %v3014
    %v3074 = vmul.f32 %v2981, %v3018
    %v3075 = vmul.f32 %v2983, %v3022
    %v3076 = vmul.f32 %v2985, %v3026
    %v3077 = vmul.f32 %v2987, %v3030
    %v3078 = vmul.f32 %v2989, %v3034
    %v3079 = vmul.f32 %v2991, %v3038
    %v3080 = vmul.f32 %v2993, %v3042
    %v3081 = vmul.f32 %v2995, %v3046
    %v3082 = vmul.f32 %v2997, %v3050
    %v3083 = vmul.f32 %v2999, %v3054
    %v3084 = vmul.f32 %v3001, %v3058
    %v3085 = vmul.f32 %v3003, %v3062
    %v3086 = vmul.f32 %v3005, %v3066
    %v3087 = vmul.f32 %v3007, %v3070
    %v3088 = vadd.f32 %v3072, %v3073
    %v3089 = vadd.f32 %v3088, %v3074
    %v3090 = vadd.f32 %v3089, %v3075
    %v3091 = vadd.f32 %v3090, %v3076
    %v3092 = vadd.f32 %v3091, %v3077
    %v3093 = vadd.f32 %v3092, %v3078
    %v3094 = vadd.f32 %v3093, %v3079
    %v3095 = vadd.f32 %v3094, %v3080
    %v3096 = vadd.f32 %v3095, %v3081
    %v3097 = vadd.f32 %v3096, %v3082
    %v3098 = vadd.f32 %v3097, %v3083
    %v3099 = vadd.f32 %v3098, %v3084
    %v3100 = vadd.f32 %v3099, %v3085
    %v3101 = vadd.f32 %v3100, %v3086
    %v3102 = vadd.f32 %v3101, %v3087
    %v3103 = vrot.slane %v3102, 4
    %v3104 = vadd.f32 %v3102, %v3103
    %v3105 = vrot.slane %v3104, 2
    %v3106 = vadd.f32 %v3104, %v3105
    %v3107 = vrot.slane %v3106, 1
    %v3108 = vadd.f32 %v3106, %v3107
    %v3109 = vadd.f32 %v3108, 0.0
    %v3110 = vadd.f32 %v2977, %v2979
    %v3111 = vadd.f32 %v3110, %v2981
    %v3112 = vadd.f32 %v3111, %v2983
    %v3113 = vadd.f32 %v3112, %v2985
    %v3114 = vadd.f32 %v3113, %v2987
    %v3115 = vadd.f32 %v3114, %v2989
    %v3116 = vadd.f32 %v3115, %v2991
    %v3117 = vadd.f32 %v3116, %v2993
    %v3118 = vadd.f32 %v3117, %v2995
    %v3119 = vadd.f32 %v3118, %v2997
    %v3120 = vadd.f32 %v3119, %v2999
    %v3121 = vadd.f32 %v3120, %v3001
    %v3122 = vadd.f32 %v3121, %v3003
    %v3123 = vadd.f32 %v3122, %v3005
    %v3124 = vadd.f32 %v3123, %v3007
    %v3125 = vrot.slane %v3124, 4
    %v3126 = vadd.f32 %v3124, %v3125
    %v3127 = vrot.slane %v3126, 2
    %v3128 = vadd.f32 %v3126, %v3127
    %v3129 = vrot.slane %v3128, 1
    %v3130 = vadd.f32 %v3128, %v3129
    %v3131 = vadd.f32 %v3130, 0.0
    %v3132 = vsel %vm869, %v2849, %v3109
    %v3133 = vsel %vm869, %v2871, %v3131
    %v3134 = vmul.f32 %v2579, %v2405
    %v3135 = vsub.f32 %v3132, %v3134
    %v3136 = vrcp.pop %v3133
    %v3137 = vmul.f32 %v3135, %v3136
    %s3138 = sld [smem:[#allocation2 + $0x3]]
    %v3139 = vstv %s3138
    %v3140 = vmul.f32 %v3137, %v3139
    %v3141 = vadd.f32 %v2387, %v3140
    %3142 = vst [vmem:[#allocation5] sm:$0x3] %v3141
    // Predicated region
    $region38: #{tpu_custom_call.1} parent=1 // pred_check
      _
    $region39: #{tpu_custom_call.1} parent=1 // pred_check_branch
      %3144 = sbr.rel (0) target = $region41
    $region40: #{tpu_custom_call.1} parent=1 // pred_region
      %s3146 = ssub.s32 32, 32
      %3147 = vsyncadd [#allocation3], %s3146
      %s3149 = sshll.u32 [#allocation5], 4
      %s3150 = int_to_ptr.vmem [resolvable:$true] %s3149
      %3152 = dma.vmem_to_hbm [thread:$0]  %s3150, 32, %s8, [#allocation3]
    $region41: #{tpu_custom_call.1} parent=1 // pred_fallthru
      _
    // Predicated region
    $region42: #{tpu_custom_call.1} parent=1 // pred_check
      _
    $region43: #{tpu_custom_call.1} parent=1 // pred_check_branch
      %3154 = sbr.rel (0) target = $region45
    $region44: #{tpu_custom_call.1} parent=1 // pred_region
      %3155 = dma.done [#allocation3], 32
    $region45: #{tpu_custom_call.1} parent=1 // pred_fallthru
      _
    %3156 = vsyncpa [#allocation3], 1
    %3157 = vsyncpa [#allocation4], 1

</llo_original>
